<compile_context>
chip_gen: v6e
topology: v6e:2x2x1
jax: 0.10.0
libtpu: 0.0.40
codegen_flags: <defaults>
</compile_context>

<pallas_src>
import math

import jax
import jax.numpy as jnp
import numpy as np
from jax.experimental import pallas as pl
from jax.experimental.pallas import tpu as pltpu

# ---- Model config (mirrors VariableLSTMNet(nClasses, input_size,
#      bidirectional, hidden_size, num_layers, device)) ----
N_CLASSES = 5
INPUT_SIZE = 16
BIDIRECTIONAL = True
HIDDEN_SIZE = 32
NUM_LAYERS = 2
BATCH = 2
SEQ_LEN = 8

NUM_DIRS = 2 if BIDIRECTIONAL else 1


# ------------------------------ fused kernel --------------------------------
def _make_fused_kernel(T, B, H, L, D, C):
    """Builds the fused (bi-LSTM stack + ReLU + Linear + Softmax) kernel."""
    assert D == 2, "kernel implements the bidirectional (D=2) configuration"
    DH = D * H          # fused state width: [fwd | bwd]
    f32, bf16 = jnp.float32, jnp.bfloat16

    def kernel(*refs):
        idx = 0
        x0_ref = refs[idx]; idx += 1            # (T*B, 2*F0) bf16: [x(s) | x(T-1-s)]
        w0_ref = refs[idx]; idx += 1            # (2*F0, 8H)  bf16
        whh_refs, b_refs = [], []
        for _ in range(L):
            whh_refs.append(refs[idx]); idx += 1   # (2H, 8H) bf16, block-structured
            b_refs.append(refs[idx]); idx += 1     # (1, 8H)  f32
        a_refs, bm_refs = [], []
        for _ in range(L - 1):
            a_refs.append(refs[idx]); idx += 1     # (2H, 8H) bf16  (next-layer W_ih, "same row")
            bm_refs.append(refs[idx]); idx += 1    # (2H, 8H) bf16  (next-layer W_ih, "mirror row")
        fcw_ref = refs[idx]; idx += 1              # (D*H, C) f32
        fcb_ref = refs[idx]; idx += 1              # (1, C)   f32
        out_ref = refs[idx]                        # (L*B, C) f32

        # Layer-0 hoisted input projection: ONE lane-dense 256-wide matmul for
        # all timesteps and BOTH directions (bwd time reversal already folded
        # into the augmented input columns).
        xp0 = (jnp.dot(x0_ref[...], w0_ref[...], preferred_element_type=f32)
               + b_refs[0][...])
        xp_rows = [xp0[s * B:(s + 1) * B, :] for s in range(T)]   # each (B, 8H)

        finals = {}
        for layer in range(L):
            whh = whh_refs[layer][...]
            last = layer == L - 1
            if not last:
                a_w = a_refs[layer][...]
                b_w = bm_refs[layer][...]
                next_rows = [None] * T
            h_cat = jnp.zeros((B, DH), f32)
            c_cat = jnp.zeros((B, DH), f32)
            h_b16 = h_cat.astype(bf16)
            for s in range(T):                     # static T -> fully unrolled
                # ONE fused-direction recurrent matmul per step (bf16 -> f32 acc).
                gates = xp_rows[s] + jnp.dot(h_b16, whh, preferred_element_type=f32)
                # Full-width sigmoid covers i|f|o of both directions at once.
                sig = jax.nn.sigmoid(gates)
                i_g = sig[:, 0 * DH:1 * DH]        # [i_f | i_b]
                f_g = sig[:, 1 * DH:2 * DH]        # [f_f | f_b]
                o_g = sig[:, 3 * DH:4 * DH]        # [o_f | o_b]
                g_g = jnp.tanh(gates[:, 2 * DH:3 * DH])   # [g_f | g_b]
                c_cat = f_g * c_cat + i_g * g_g
                h_cat = o_g * jnp.tanh(c_cat)
                h_b16 = h_cat.astype(bf16)
                if not last:
                    # Online accumulation of the NEXT layer's input projection.
                    # h_cat = [h_fwd(t=s) | h_bwd(t=T-1-s)] contributes to the
                    # next layer's xp rows s (via A) and T-1-s (via Bm); these
                    # matmuls are off the h->h dependence chain.
                    cs = jnp.dot(h_b16, a_w, preferred_element_type=f32)
                    cr = jnp.dot(h_b16, b_w, preferred_element_type=f32)
                    r = T - 1 - s
                    next_rows[s] = cs if next_rows[s] is None else next_rows[s] + cs
                    next_rows[r] = cr if next_rows[r] is None else next_rows[r] + cr
            finals[(layer, 0)] = h_cat[:, :H]      # forward final hidden  (B, H)
            finals[(layer, 1)] = h_cat[:, H:]      # backward final hidden (B, H)
            if not last:
                bias_n = b_refs[layer + 1][...]
                xp_rows = [row + bias_n for row in next_rows]

        # hn exactly in torch's hn.view(-1, D*H) layout, assembled in registers
        # (no per-batch masked stores, no hn scratch).
        rows = []
        for r in range(L * B):
            pieces = []
            for j in range(D):
                q = r * D + j                      # flat H-chunk index of hn
                ll = q // (D * B)
                d = (q % (D * B)) // B
                b = q % B
                pieces.append(finals[(ll, d)][b:b + 1, :])
            rows.append(jnp.concatenate(pieces, axis=1))
        hn_flat = jnp.concatenate(rows, axis=0)    # (L*B, D*H)

        # Fused head: ReLU -> Linear -> Softmax(dim=1).
        hr = jnp.maximum(hn_flat, 0.0)
        logits = jnp.dot(hr, fcw_ref[...], preferred_element_type=f32) + fcb_ref[...]
        m = jnp.max(logits, axis=1, keepdims=True)
        e = jnp.exp(logits - m)
        out_ref[...] = e / jnp.sum(e, axis=1, keepdims=True)

    return kernel


# --------------------------- host-side weight packing ------------------------
def _scatter_gate_cols(dst, src, d, row_off):
    """Place per-direction weight/bias `src` (rows, 4H), columns ordered i|f|g|o,
    into `dst`'s gate-major fused columns [i_f|i_b|f_f|f_b|g_f|g_b|o_f|o_b]
    for direction `d`, at row offset `row_off`."""
    H = HIDDEN_SIZE
    rows = src.shape[0]
    for g_idx in range(4):
        dst = dst.at[row_off:row_off + rows,
                     (2 * g_idx + d) * H:(2 * g_idx + d + 1) * H].set(
            src[:, g_idx * H:(g_idx + 1) * H])
    return dst


def pack_params(params):
    """Fuse per-direction weights into the kernel's gate-major, direction-fused,
    bf16 operand layout (one-time host-side cost)."""
    H, D, L = HIDDEN_SIZE, NUM_DIRS, NUM_LAYERS
    G2 = 2 * 4 * H
    packed = {}

    # Layer-0 augmented input-projection weight: rows 0:F act on x(t=s) -> fwd
    # gate columns; rows F:2F act on x(t=T-1-s) -> bwd gate columns.
    F0 = params["lstm"][0][0][0].shape[0]
    w0 = jnp.zeros((2 * F0, G2), jnp.float32)
    w0 = _scatter_gate_cols(w0, params["lstm"][0][0][0], 0, 0)
    w0 = _scatter_gate_cols(w0, params["lstm"][0][1][0], 1, F0)
    packed["w0_aug"] = w0.astype(jnp.bfloat16)

    packed["whh"], packed["bias"] = [], []
    for l in range(L):
        whh = jnp.zeros((2 * H, G2), jnp.float32)      # block-structured W_hh
        whh = _scatter_gate_cols(whh, params["lstm"][l][0][1], 0, 0)
        whh = _scatter_gate_cols(whh, params["lstm"][l][1][1], 1, H)
        packed["whh"].append(whh.astype(jnp.bfloat16))
        bias = jnp.zeros((1, G2), jnp.float32)
        bias = _scatter_gate_cols(bias, params["lstm"][l][0][2], 0, 0)
        bias = _scatter_gate_cols(bias, params["lstm"][l][1][2], 1, 0)
        packed["bias"].append(bias)

    # Online next-layer input-projection operands.  At fused step s the state
    # h_cat = [h_fwd(s) | h_bwd(T-1-s)] contributes:
    #   A  -> next-layer xp row s     (fwd cols from Wf^T[:H],  bwd cols from Wb^T[H:])
    #   Bm -> next-layer xp row T-1-s (bwd cols from Wb^T[:H],  fwd cols from Wf^T[H:])
    packed["A"], packed["Bm"] = [], []
    for l in range(L - 1):
        wf = params["lstm"][l + 1][0][0]   # (2H, 4H)
        wb = params["lstm"][l + 1][1][0]   # (2H, 4H)
        a = jnp.zeros((2 * H, G2), jnp.float32)
        a = _scatter_gate_cols(a, wf[:H, :], 0, 0)
        a = _scatter_gate_cols(a, wb[H:, :], 1, H)
        bm = jnp.zeros((2 * H, G2), jnp.float32)
        bm = _scatter_gate_cols(bm, wb[:H, :], 1, 0)
        bm = _scatter_gate_cols(bm, wf[H:, :], 0, H)
        packed["A"].append(a.astype(jnp.bfloat16))
        packed["Bm"].append(bm.astype(jnp.bfloat16))

    packed["fc_w"] = params["fc_w"]
    packed["fc_b"] = params["fc_b"]
    return packed


# ------------------------------- forward wrapper -----------------------------
def variable_lstm_net_forward(x, packed):
    """x: (B, T, input_size), batch_first like the torch module."""
    B, T, F = x.shape
    H, D, L, C = HIDDEN_SIZE, NUM_DIRS, NUM_LAYERS, N_CLASSES
    assert D == 2

    # Augmented layer-0 input: row s*B+b = [ x[b, s, :] | x[b, T-1-s, :] ]
    # (the backward-direction time reversal, done once as plain XLA layout ops).
    x_fwd = jnp.transpose(x, (1, 0, 2)).reshape(T * B, F)
    x_bwd = jnp.transpose(x[:, ::-1, :], (1, 0, 2)).reshape(T * B, F)
    x0_aug = jnp.concatenate([x_fwd, x_bwd], axis=1).astype(jnp.bfloat16)

    args = [x0_aug, packed["w0_aug"]]
    for l in range(L):
        args += [packed["whh"][l], packed["bias"][l]]
    for l in range(L - 1):
        args += [packed["A"][l], packed["Bm"][l]]
    args += [packed["fc_w"], packed["fc_b"]]

    kernel = _make_fused_kernel(T=T, B=B, H=H, L=L, D=D, C=C)
    return pl.pallas_call(
        kernel,
        out_shape=jax.ShapeDtypeStruct((L * B, C), jnp.float32),
        in_specs=[pl.BlockSpec(memory_space=pltpu.MemorySpace.VMEM)] * len(args),
        out_specs=pl.BlockSpec(memory_space=pltpu.MemorySpace.VMEM),
    )(*args)


# --------------------------- deterministic params ----------------------------
def init_params(key):
    H, D = HIDDEN_SIZE, NUM_DIRS
    G = 4 * H
    bound = 1.0 / math.sqrt(H)
    params = {"lstm": {}}
    for layer in range(NUM_LAYERS):
        in_f = INPUT_SIZE if layer == 0 else D * H
        dirs = []
        for _ in range(D):
            key, k1, k2, k3, k4 = jax.random.split(key, 5)
            w_ih = jax.random.uniform(k1, (in_f, G), jnp.float32, -bound, bound)
            w_hh = jax.random.uniform(k2, (H, G), jnp.float32, -bound, bound)
            b_ih = jax.random.uniform(k3, (1, G), jnp.float32, -bound, bound)
            b_hh = jax.random.uniform(k4, (1, G), jnp.float32, -bound, bound)
            dirs.append((w_ih, w_hh, b_ih + b_hh))
        params["lstm"][layer] = dirs
    fc_in = D * H
    fb = 1.0 / math.sqrt(fc_in)
    key, k1, k2 = jax.random.split(key, 3)
    params["fc_w"] = jax.random.uniform(k1, (fc_in, N_CLASSES), jnp.float32, -fb, fb)
    params["fc_b"] = jax.random.uniform(k2, (1, N_CLASSES), jnp.float32, -fb, fb)
    return params


# ------------------------------ pure-JAX reference ---------------------------
def ref_forward(x, params):
    H, D, L = HIDDEN_SIZE, NUM_DIRS, NUM_LAYERS
    x_tm = jnp.transpose(x, (1, 0, 2))              # (T, B, F)
    layer_in = x_tm
    hn_list = []
    for l in range(L):
        dir_outs = []
        for d in range(D):
            w_ih, w_hh, b = params["lstm"][l][d]
            inp = layer_in if d == 0 else layer_in[::-1]
            T_, B_, _ = inp.shape
            h = jnp.zeros((B_, H), jnp.float32)
            c = jnp.zeros((B_, H), jnp.float32)
            hs = []
            for t in range(T_):
                g = inp[t] @ w_ih + h @ w_hh + b
                i_g = jax.nn.sigmoid(g[:, 0:H])
                f_g = jax.nn.sigmoid(g[:, H:2 * H])
                g_g = jnp.tanh(g[:, 2 * H:3 * H])
                o_g = jax.nn.sigmoid(g[:, 3 * H:4 * H])
                c = f_g * c + i_g * g_g
                h = o_g * jnp.tanh(c)
                hs.append(h)
            hn_list.append(h)
            hseq = jnp.stack(hs)
            if d == 1:
                hseq = hseq[::-1]
            dir_outs.append(hseq)
        layer_in = jnp.concatenate(dir_outs, axis=-1)
    hn = jnp.stack(hn_list, axis=0).reshape(-1, D * H)   # == torch hn.view(-1, D*H)
    out = jnp.maximum(hn, 0.0)
    logits = out @ params["fc_w"] + params["fc_b"]
    return jax.nn.softmax(logits, axis=1)


if __name__ == "__main__":
    key = jax.random.PRNGKey(0)
    pkey, xkey = jax.random.split(key)
    params = init_params(pkey)
    packed = pack_params(params)
    x = jax.random.normal(xkey, (BATCH, SEQ_LEN, INPUT_SIZE), jnp.float32)

    fwd = jax.jit(variable_lstm_net_forward)
    out = jax.block_until_ready(fwd(x, packed))

    ref = jax.block_until_ready(ref_forward(x, params))
    # bf16 MXU operands (f32 accumulation / state): slightly looser tolerance
    # than the pure-f32 version, still far below typical class-probability gaps.
    np.testing.assert_allclose(np.asarray(out), np.asarray(ref),
                               atol=2e-2, rtol=2e-2)
    print("KERNEL_OK")
</pallas_src>

<mosaic_0001>
module attributes {stable_mosaic.version = 11 : i64} {
  func.func @kernel(%arg0: memref<16x32xbf16, #tpu.memory_space<vmem>>, %arg1: memref<32x256xbf16, #tpu.memory_space<vmem>>, %arg2: memref<64x256xbf16, #tpu.memory_space<vmem>>, %arg3: memref<1x256xf32, #tpu.memory_space<vmem>>, %arg4: memref<64x256xbf16, #tpu.memory_space<vmem>>, %arg5: memref<1x256xf32, #tpu.memory_space<vmem>>, %arg6: memref<64x256xbf16, #tpu.memory_space<vmem>>, %arg7: memref<64x256xbf16, #tpu.memory_space<vmem>>, %arg8: memref<64x5xf32, #tpu.memory_space<vmem>>, %arg9: memref<1x5xf32, #tpu.memory_space<vmem>>, %arg10: memref<4x5xf32, #tpu.memory_space<vmem>>) attributes {dimension_semantics = [], scalar_prefetch = 0 : i64, scratch_operands = 0 : i64, tpu.core_type = #tpu.core_type<tc>} {
    %c0 = arith.constant 0 : index
    %c0_0 = arith.constant 0 : index
    %0 = vector.load %arg0[%c0, %c0_0] : memref<16x32xbf16, #tpu.memory_space<vmem>>, vector<16x32xbf16>
    %c0_1 = arith.constant 0 : index
    %c0_2 = arith.constant 0 : index
    %1 = vector.load %arg1[%c0_1, %c0_2] : memref<32x256xbf16, #tpu.memory_space<vmem>>, vector<32x256xbf16>
    %cst = arith.constant dense<0.000000e+00> : vector<16x256xf32>
    %2 = tpu.matmul %0, %1, %cst {dimension_numbers = #tpu.dot_dimension_numbers<[1], [0], [0], [1], [0, 0, 1, 1], [], []>} : vector<16x32xbf16>, vector<32x256xbf16>, vector<16x256xf32> -> vector<16x256xf32>
    %c0_3 = arith.constant 0 : index
    %c0_4 = arith.constant 0 : index
    %3 = vector.load %arg3[%c0_3, %c0_4] : memref<1x256xf32, #tpu.memory_space<vmem>>, vector<1x256xf32>
    %4 = vector.broadcast %3 : vector<1x256xf32> to vector<16x256xf32>
    %5 = arith.addf %2, %4 : vector<16x256xf32>
    %6 = vector.extract_strided_slice %5 {offsets = [0, 0], sizes = [2, 256], strides = [1, 1]} : vector<16x256xf32> to vector<2x256xf32>
    %7 = vector.extract_strided_slice %5 {offsets = [2, 0], sizes = [2, 256], strides = [1, 1]} : vector<16x256xf32> to vector<2x256xf32>
    %8 = vector.extract_strided_slice %5 {offsets = [4, 0], sizes = [2, 256], strides = [1, 1]} : vector<16x256xf32> to vector<2x256xf32>
    %9 = vector.extract_strided_slice %5 {offsets = [6, 0], sizes = [2, 256], strides = [1, 1]} : vector<16x256xf32> to vector<2x256xf32>
    %10 = vector.extract_strided_slice %5 {offsets = [8, 0], sizes = [2, 256], strides = [1, 1]} : vector<16x256xf32> to vector<2x256xf32>
    %11 = vector.extract_strided_slice %5 {offsets = [10, 0], sizes = [2, 256], strides = [1, 1]} : vector<16x256xf32> to vector<2x256xf32>
    %12 = vector.extract_strided_slice %5 {offsets = [12, 0], sizes = [2, 256], strides = [1, 1]} : vector<16x256xf32> to vector<2x256xf32>
    %13 = vector.extract_strided_slice %5 {offsets = [14, 0], sizes = [2, 256], strides = [1, 1]} : vector<16x256xf32> to vector<2x256xf32>
    %c0_5 = arith.constant 0 : index
    %c0_6 = arith.constant 0 : index
    %14 = vector.load %arg2[%c0_5, %c0_6] : memref<64x256xbf16, #tpu.memory_space<vmem>>, vector<64x256xbf16>
    %c0_7 = arith.constant 0 : index
    %c0_8 = arith.constant 0 : index
    %15 = vector.load %arg6[%c0_7, %c0_8] : memref<64x256xbf16, #tpu.memory_space<vmem>>, vector<64x256xbf16>
    %c0_9 = arith.constant 0 : index
    %c0_10 = arith.constant 0 : index
    %16 = vector.load %arg7[%c0_9, %c0_10] : memref<64x256xbf16, #tpu.memory_space<vmem>>, vector<64x256xbf16>
    %cst_11 = arith.constant 0.000000e+00 : f32
    %17 = vector.broadcast %cst_11 : f32 to vector<2x64xf32>
    %cst_12 = arith.constant 0.000000e+00 : f32
    %18 = vector.broadcast %cst_12 : f32 to vector<2x64xf32>
    %19 = arith.truncf %17 : vector<2x64xf32> to vector<2x64xbf16>
    %cst_13 = arith.constant dense<0.000000e+00> : vector<2x256xf32>
    %20 = tpu.matmul %19, %14, %cst_13 {dimension_numbers = #tpu.dot_dimension_numbers<[1], [0], [0], [1], [0, 0, 1, 1], [], []>} : vector<2x64xbf16>, vector<64x256xbf16>, vector<2x256xf32> -> vector<2x256xf32>
    %21 = arith.addf %6, %20 : vector<2x256xf32>
    %22 = arith.negf %21 : vector<2x256xf32>
    %23 = math.exp %22 : vector<2x256xf32>
    %cst_14 = arith.constant 1.000000e+00 : f32
    %24 = vector.broadcast %cst_14 : f32 to vector<2x256xf32>
    %25 = arith.addf %24, %23 : vector<2x256xf32>
    %26 = arith.divf %24, %25 : vector<2x256xf32>
    %27 = vector.extract_strided_slice %26 {offsets = [0, 0], sizes = [2, 64], strides = [1, 1]} : vector<2x256xf32> to vector<2x64xf32>
    %28 = vector.extract_strided_slice %26 {offsets = [0, 64], sizes = [2, 64], strides = [1, 1]} : vector<2x256xf32> to vector<2x64xf32>
    %29 = vector.extract_strided_slice %26 {offsets = [0, 192], sizes = [2, 64], strides = [1, 1]} : vector<2x256xf32> to vector<2x64xf32>
    %30 = vector.extract_strided_slice %21 {offsets = [0, 128], sizes = [2, 64], strides = [1, 1]} : vector<2x256xf32> to vector<2x64xf32>
    %31 = math.tanh %30 : vector<2x64xf32>
    %32 = arith.mulf %28, %18 : vector<2x64xf32>
    %33 = arith.mulf %27, %31 : vector<2x64xf32>
    %34 = arith.addf %32, %33 : vector<2x64xf32>
    %35 = math.tanh %34 : vector<2x64xf32>
    %36 = arith.mulf %29, %35 : vector<2x64xf32>
    %37 = arith.truncf %36 : vector<2x64xf32> to vector<2x64xbf16>
    %cst_15 = arith.constant dense<0.000000e+00> : vector<2x256xf32>
    %38 = tpu.matmul %37, %15, %cst_15 {dimension_numbers = #tpu.dot_dimension_numbers<[1], [0], [0], [1], [0, 0, 1, 1], [], []>} : vector<2x64xbf16>, vector<64x256xbf16>, vector<2x256xf32> -> vector<2x256xf32>
    %cst_16 = arith.constant dense<0.000000e+00> : vector<2x256xf32>
    %39 = tpu.matmul %37, %16, %cst_16 {dimension_numbers = #tpu.dot_dimension_numbers<[1], [0], [0], [1], [0, 0, 1, 1], [], []>} : vector<2x64xbf16>, vector<64x256xbf16>, vector<2x256xf32> -> vector<2x256xf32>
    %cst_17 = arith.constant dense<0.000000e+00> : vector<2x256xf32>
    %40 = tpu.matmul %37, %14, %cst_17 {dimension_numbers = #tpu.dot_dimension_numbers<[1], [0], [0], [1], [0, 0, 1, 1], [], []>} : vector<2x64xbf16>, vector<64x256xbf16>, vector<2x256xf32> -> vector<2x256xf32>
    %41 = arith.addf %7, %40 : vector<2x256xf32>
    %42 = arith.negf %41 : vector<2x256xf32>
    %43 = math.exp %42 : vector<2x256xf32>
    %cst_18 = arith.constant 1.000000e+00 : f32
    %44 = vector.broadcast %cst_18 : f32 to vector<2x256xf32>
    %45 = arith.addf %44, %43 : vector<2x256xf32>
    %46 = arith.divf %44, %45 : vector<2x256xf32>
    %47 = vector.extract_strided_slice %46 {offsets = [0, 0], sizes = [2, 64], strides = [1, 1]} : vector<2x256xf32> to vector<2x64xf32>
    %48 = vector.extract_strided_slice %46 {offsets = [0, 64], sizes = [2, 64], strides = [1, 1]} : vector<2x256xf32> to vector<2x64xf32>
    %49 = vector.extract_strided_slice %46 {offsets = [0, 192], sizes = [2, 64], strides = [1, 1]} : vector<2x256xf32> to vector<2x64xf32>
    %50 = vector.extract_strided_slice %41 {offsets = [0, 128], sizes = [2, 64], strides = [1, 1]} : vector<2x256xf32> to vector<2x64xf32>
    %51 = math.tanh %50 : vector<2x64xf32>
    %52 = arith.mulf %48, %34 : vector<2x64xf32>
    %53 = arith.mulf %47, %51 : vector<2x64xf32>
    %54 = arith.addf %52, %53 : vector<2x64xf32>
    %55 = math.tanh %54 : vector<2x64xf32>
    %56 = arith.mulf %49, %55 : vector<2x64xf32>
    %57 = arith.truncf %56 : vector<2x64xf32> to vector<2x64xbf16>
    %cst_19 = arith.constant dense<0.000000e+00> : vector<2x256xf32>
    %58 = tpu.matmul %57, %15, %cst_19 {dimension_numbers = #tpu.dot_dimension_numbers<[1], [0], [0], [1], [0, 0, 1, 1], [], []>} : vector<2x64xbf16>, vector<64x256xbf16>, vector<2x256xf32> -> vector<2x256xf32>
    %cst_20 = arith.constant dense<0.000000e+00> : vector<2x256xf32>
    %59 = tpu.matmul %57, %16, %cst_20 {dimension_numbers = #tpu.dot_dimension_numbers<[1], [0], [0], [1], [0, 0, 1, 1], [], []>} : vector<2x64xbf16>, vector<64x256xbf16>, vector<2x256xf32> -> vector<2x256xf32>
    %cst_21 = arith.constant dense<0.000000e+00> : vector<2x256xf32>
    %60 = tpu.matmul %57, %14, %cst_21 {dimension_numbers = #tpu.dot_dimension_numbers<[1], [0], [0], [1], [0, 0, 1, 1], [], []>} : vector<2x64xbf16>, vector<64x256xbf16>, vector<2x256xf32> -> vector<2x256xf32>
    %61 = arith.addf %8, %60 : vector<2x256xf32>
    %62 = arith.negf %61 : vector<2x256xf32>
    %63 = math.exp %62 : vector<2x256xf32>
    %cst_22 = arith.constant 1.000000e+00 : f32
    %64 = vector.broadcast %cst_22 : f32 to vector<2x256xf32>
    %65 = arith.addf %64, %63 : vector<2x256xf32>
    %66 = arith.divf %64, %65 : vector<2x256xf32>
    %67 = vector.extract_strided_slice %66 {offsets = [0, 0], sizes = [2, 64], strides = [1, 1]} : vector<2x256xf32> to vector<2x64xf32>
    %68 = vector.extract_strided_slice %66 {offsets = [0, 64], sizes = [2, 64], strides = [1, 1]} : vector<2x256xf32> to vector<2x64xf32>
    %69 = vector.extract_strided_slice %66 {offsets = [0, 192], sizes = [2, 64], strides = [1, 1]} : vector<2x256xf32> to vector<2x64xf32>
    %70 = vector.extract_strided_slice %61 {offsets = [0, 128], sizes = [2, 64], strides = [1, 1]} : vector<2x256xf32> to vector<2x64xf32>
    %71 = math.tanh %70 : vector<2x64xf32>
    %72 = arith.mulf %68, %54 : vector<2x64xf32>
    %73 = arith.mulf %67, %71 : vector<2x64xf32>
    %74 = arith.addf %72, %73 : vector<2x64xf32>
    %75 = math.tanh %74 : vector<2x64xf32>
    %76 = arith.mulf %69, %75 : vector<2x64xf32>
    %77 = arith.truncf %76 : vector<2x64xf32> to vector<2x64xbf16>
    %cst_23 = arith.constant dense<0.000000e+00> : vector<2x256xf32>
    %78 = tpu.matmul %77, %15, %cst_23 {dimension_numbers = #tpu.dot_dimension_numbers<[1], [0], [0], [1], [0, 0, 1, 1], [], []>} : vector<2x64xbf16>, vector<64x256xbf16>, vector<2x256xf32> -> vector<2x256xf32>
    %cst_24 = arith.constant dense<0.000000e+00> : vector<2x256xf32>
    %79 = tpu.matmul %77, %16, %cst_24 {dimension_numbers = #tpu.dot_dimension_numbers<[1], [0], [0], [1], [0, 0, 1, 1], [], []>} : vector<2x64xbf16>, vector<64x256xbf16>, vector<2x256xf32> -> vector<2x256xf32>
    %cst_25 = arith.constant dense<0.000000e+00> : vector<2x256xf32>
    %80 = tpu.matmul %77, %14, %cst_25 {dimension_numbers = #tpu.dot_dimension_numbers<[1], [0], [0], [1], [0, 0, 1, 1], [], []>} : vector<2x64xbf16>, vector<64x256xbf16>, vector<2x256xf32> -> vector<2x256xf32>
    %81 = arith.addf %9, %80 : vector<2x256xf32>
    %82 = arith.negf %81 : vector<2x256xf32>
    %83 = math.exp %82 : vector<2x256xf32>
    %cst_26 = arith.constant 1.000000e+00 : f32
    %84 = vector.broadcast %cst_26 : f32 to vector<2x256xf32>
    %85 = arith.addf %84, %83 : vector<2x256xf32>
    %86 = arith.divf %84, %85 : vector<2x256xf32>
    %87 = vector.extract_strided_slice %86 {offsets = [0, 0], sizes = [2, 64], strides = [1, 1]} : vector<2x256xf32> to vector<2x64xf32>
    %88 = vector.extract_strided_slice %86 {offsets = [0, 64], sizes = [2, 64], strides = [1, 1]} : vector<2x256xf32> to vector<2x64xf32>
    %89 = vector.extract_strided_slice %86 {offsets = [0, 192], sizes = [2, 64], strides = [1, 1]} : vector<2x256xf32> to vector<2x64xf32>
    %90 = vector.extract_strided_slice %81 {offsets = [0, 128], sizes = [2, 64], strides = [1, 1]} : vector<2x256xf32> to vector<2x64xf32>
    %91 = math.tanh %90 : vector<2x64xf32>
    %92 = arith.mulf %88, %74 : vector<2x64xf32>
    %93 = arith.mulf %87, %91 : vector<2x64xf32>
    %94 = arith.addf %92, %93 : vector<2x64xf32>
    %95 = math.tanh %94 : vector<2x64xf32>
    %96 = arith.mulf %89, %95 : vector<2x64xf32>
    %97 = arith.truncf %96 : vector<2x64xf32> to vector<2x64xbf16>
    %cst_27 = arith.constant dense<0.000000e+00> : vector<2x256xf32>
    %98 = tpu.matmul %97, %15, %cst_27 {dimension_numbers = #tpu.dot_dimension_numbers<[1], [0], [0], [1], [0, 0, 1, 1], [], []>} : vector<2x64xbf16>, vector<64x256xbf16>, vector<2x256xf32> -> vector<2x256xf32>
    %cst_28 = arith.constant dense<0.000000e+00> : vector<2x256xf32>
    %99 = tpu.matmul %97, %16, %cst_28 {dimension_numbers = #tpu.dot_dimension_numbers<[1], [0], [0], [1], [0, 0, 1, 1], [], []>} : vector<2x64xbf16>, vector<64x256xbf16>, vector<2x256xf32> -> vector<2x256xf32>
    %cst_29 = arith.constant dense<0.000000e+00> : vector<2x256xf32>
    %100 = tpu.matmul %97, %14, %cst_29 {dimension_numbers = #tpu.dot_dimension_numbers<[1], [0], [0], [1], [0, 0, 1, 1], [], []>} : vector<2x64xbf16>, vector<64x256xbf16>, vector<2x256xf32> -> vector<2x256xf32>
    %101 = arith.addf %10, %100 : vector<2x256xf32>
    %102 = arith.negf %101 : vector<2x256xf32>
    %103 = math.exp %102 : vector<2x256xf32>
    %cst_30 = arith.constant 1.000000e+00 : f32
    %104 = vector.broadcast %cst_30 : f32 to vector<2x256xf32>
    %105 = arith.addf %104, %103 : vector<2x256xf32>
    %106 = arith.divf %104, %105 : vector<2x256xf32>
    %107 = vector.extract_strided_slice %106 {offsets = [0, 0], sizes = [2, 64], strides = [1, 1]} : vector<2x256xf32> to vector<2x64xf32>
    %108 = vector.extract_strided_slice %106 {offsets = [0, 64], sizes = [2, 64], strides = [1, 1]} : vector<2x256xf32> to vector<2x64xf32>
    %109 = vector.extract_strided_slice %106 {offsets = [0, 192], sizes = [2, 64], strides = [1, 1]} : vector<2x256xf32> to vector<2x64xf32>
    %110 = vector.extract_strided_slice %101 {offsets = [0, 128], sizes = [2, 64], strides = [1, 1]} : vector<2x256xf32> to vector<2x64xf32>
    %111 = math.tanh %110 : vector<2x64xf32>
    %112 = arith.mulf %108, %94 : vector<2x64xf32>
    %113 = arith.mulf %107, %111 : vector<2x64xf32>
    %114 = arith.addf %112, %113 : vector<2x64xf32>
    %115 = math.tanh %114 : vector<2x64xf32>
    %116 = arith.mulf %109, %115 : vector<2x64xf32>
    %117 = arith.truncf %116 : vector<2x64xf32> to vector<2x64xbf16>
    %cst_31 = arith.constant dense<0.000000e+00> : vector<2x256xf32>
    %118 = tpu.matmul %117, %15, %cst_31 {dimension_numbers = #tpu.dot_dimension_numbers<[1], [0], [0], [1], [0, 0, 1, 1], [], []>} : vector<2x64xbf16>, vector<64x256xbf16>, vector<2x256xf32> -> vector<2x256xf32>
    %cst_32 = arith.constant dense<0.000000e+00> : vector<2x256xf32>
    %119 = tpu.matmul %117, %16, %cst_32 {dimension_numbers = #tpu.dot_dimension_numbers<[1], [0], [0], [1], [0, 0, 1, 1], [], []>} : vector<2x64xbf16>, vector<64x256xbf16>, vector<2x256xf32> -> vector<2x256xf32>
    %120 = arith.addf %99, %118 : vector<2x256xf32>
    %121 = arith.addf %98, %119 : vector<2x256xf32>
    %cst_33 = arith.constant dense<0.000000e+00> : vector<2x256xf32>
    %122 = tpu.matmul %117, %14, %cst_33 {dimension_numbers = #tpu.dot_dimension_numbers<[1], [0], [0], [1], [0, 0, 1, 1], [], []>} : vector<2x64xbf16>, vector<64x256xbf16>, vector<2x256xf32> -> vector<2x256xf32>
    %123 = arith.addf %11, %122 : vector<2x256xf32>
    %124 = arith.negf %123 : vector<2x256xf32>
    %125 = math.exp %124 : vector<2x256xf32>
    %cst_34 = arith.constant 1.000000e+00 : f32
    %126 = vector.broadcast %cst_34 : f32 to vector<2x256xf32>
    %127 = arith.addf %126, %125 : vector<2x256xf32>
    %128 = arith.divf %126, %127 : vector<2x256xf32>
    %129 = vector.extract_strided_slice %128 {offsets = [0, 0], sizes = [2, 64], strides = [1, 1]} : vector<2x256xf32> to vector<2x64xf32>
    %130 = vector.extract_strided_slice %128 {offsets = [0, 64], sizes = [2, 64], strides = [1, 1]} : vector<2x256xf32> to vector<2x64xf32>
    %131 = vector.extract_strided_slice %128 {offsets = [0, 192], sizes = [2, 64], strides = [1, 1]} : vector<2x256xf32> to vector<2x64xf32>
    %132 = vector.extract_strided_slice %123 {offsets = [0, 128], sizes = [2, 64], strides = [1, 1]} : vector<2x256xf32> to vector<2x64xf32>
    %133 = math.tanh %132 : vector<2x64xf32>
    %134 = arith.mulf %130, %114 : vector<2x64xf32>
    %135 = arith.mulf %129, %133 : vector<2x64xf32>
    %136 = arith.addf %134, %135 : vector<2x64xf32>
    %137 = math.tanh %136 : vector<2x64xf32>
    %138 = arith.mulf %131, %137 : vector<2x64xf32>
    %139 = arith.truncf %138 : vector<2x64xf32> to vector<2x64xbf16>
    %cst_35 = arith.constant dense<0.000000e+00> : vector<2x256xf32>
    %140 = tpu.matmul %139, %15, %cst_35 {dimension_numbers = #tpu.dot_dimension_numbers<[1], [0], [0], [1], [0, 0, 1, 1], [], []>} : vector<2x64xbf16>, vector<64x256xbf16>, vector<2x256xf32> -> vector<2x256xf32>
    %cst_36 = arith.constant dense<0.000000e+00> : vector<2x256xf32>
    %141 = tpu.matmul %139, %16, %cst_36 {dimension_numbers = #tpu.dot_dimension_numbers<[1], [0], [0], [1], [0, 0, 1, 1], [], []>} : vector<2x64xbf16>, vector<64x256xbf16>, vector<2x256xf32> -> vector<2x256xf32>
    %142 = arith.addf %79, %140 : vector<2x256xf32>
    %143 = arith.addf %78, %141 : vector<2x256xf32>
    %cst_37 = arith.constant dense<0.000000e+00> : vector<2x256xf32>
    %144 = tpu.matmul %139, %14, %cst_37 {dimension_numbers = #tpu.dot_dimension_numbers<[1], [0], [0], [1], [0, 0, 1, 1], [], []>} : vector<2x64xbf16>, vector<64x256xbf16>, vector<2x256xf32> -> vector<2x256xf32>
    %145 = arith.addf %12, %144 : vector<2x256xf32>
    %146 = arith.negf %145 : vector<2x256xf32>
    %147 = math.exp %146 : vector<2x256xf32>
    %cst_38 = arith.constant 1.000000e+00 : f32
    %148 = vector.broadcast %cst_38 : f32 to vector<2x256xf32>
    %149 = arith.addf %148, %147 : vector<2x256xf32>
    %150 = arith.divf %148, %149 : vector<2x256xf32>
    %151 = vector.extract_strided_slice %150 {offsets = [0, 0], sizes = [2, 64], strides = [1, 1]} : vector<2x256xf32> to vector<2x64xf32>
    %152 = vector.extract_strided_slice %150 {offsets = [0, 64], sizes = [2, 64], strides = [1, 1]} : vector<2x256xf32> to vector<2x64xf32>
    %153 = vector.extract_strided_slice %150 {offsets = [0, 192], sizes = [2, 64], strides = [1, 1]} : vector<2x256xf32> to vector<2x64xf32>
    %154 = vector.extract_strided_slice %145 {offsets = [0, 128], sizes = [2, 64], strides = [1, 1]} : vector<2x256xf32> to vector<2x64xf32>
    %155 = math.tanh %154 : vector<2x64xf32>
    %156 = arith.mulf %152, %136 : vector<2x64xf32>
    %157 = arith.mulf %151, %155 : vector<2x64xf32>
    %158 = arith.addf %156, %157 : vector<2x64xf32>
    %159 = math.tanh %158 : vector<2x64xf32>
    %160 = arith.mulf %153, %159 : vector<2x64xf32>
    %161 = arith.truncf %160 : vector<2x64xf32> to vector<2x64xbf16>
    %cst_39 = arith.constant dense<0.000000e+00> : vector<2x256xf32>
    %162 = tpu.matmul %161, %15, %cst_39 {dimension_numbers = #tpu.dot_dimension_numbers<[1], [0], [0], [1], [0, 0, 1, 1], [], []>} : vector<2x64xbf16>, vector<64x256xbf16>, vector<2x256xf32> -> vector<2x256xf32>
    %cst_40 = arith.constant dense<0.000000e+00> : vector<2x256xf32>
    %163 = tpu.matmul %161, %16, %cst_40 {dimension_numbers = #tpu.dot_dimension_numbers<[1], [0], [0], [1], [0, 0, 1, 1], [], []>} : vector<2x64xbf16>, vector<64x256xbf16>, vector<2x256xf32> -> vector<2x256xf32>
    %164 = arith.addf %59, %162 : vector<2x256xf32>
    %165 = arith.addf %58, %163 : vector<2x256xf32>
    %cst_41 = arith.constant dense<0.000000e+00> : vector<2x256xf32>
    %166 = tpu.matmul %161, %14, %cst_41 {dimension_numbers = #tpu.dot_dimension_numbers<[1], [0], [0], [1], [0, 0, 1, 1], [], []>} : vector<2x64xbf16>, vector<64x256xbf16>, vector<2x256xf32> -> vector<2x256xf32>
    %167 = arith.addf %13, %166 : vector<2x256xf32>
    %168 = arith.negf %167 : vector<2x256xf32>
    %169 = math.exp %168 : vector<2x256xf32>
    %cst_42 = arith.constant 1.000000e+00 : f32
    %170 = vector.broadcast %cst_42 : f32 to vector<2x256xf32>
    %171 = arith.addf %170, %169 : vector<2x256xf32>
    %172 = arith.divf %170, %171 : vector<2x256xf32>
    %173 = vector.extract_strided_slice %172 {offsets = [0, 0], sizes = [2, 64], strides = [1, 1]} : vector<2x256xf32> to vector<2x64xf32>
    %174 = vector.extract_strided_slice %172 {offsets = [0, 64], sizes = [2, 64], strides = [1, 1]} : vector<2x256xf32> to vector<2x64xf32>
    %175 = vector.extract_strided_slice %172 {offsets = [0, 192], sizes = [2, 64], strides = [1, 1]} : vector<2x256xf32> to vector<2x64xf32>
    %176 = vector.extract_strided_slice %167 {offsets = [0, 128], sizes = [2, 64], strides = [1, 1]} : vector<2x256xf32> to vector<2x64xf32>
    %177 = math.tanh %176 : vector<2x64xf32>
    %178 = arith.mulf %174, %158 : vector<2x64xf32>
    %179 = arith.mulf %173, %177 : vector<2x64xf32>
    %180 = arith.addf %178, %179 : vector<2x64xf32>
    %181 = math.tanh %180 : vector<2x64xf32>
    %182 = arith.mulf %175, %181 : vector<2x64xf32>
    %183 = arith.truncf %182 : vector<2x64xf32> to vector<2x64xbf16>
    %cst_43 = arith.constant dense<0.000000e+00> : vector<2x256xf32>
    %184 = tpu.matmul %183, %15, %cst_43 {dimension_numbers = #tpu.dot_dimension_numbers<[1], [0], [0], [1], [0, 0, 1, 1], [], []>} : vector<2x64xbf16>, vector<64x256xbf16>, vector<2x256xf32> -> vector<2x256xf32>
    %cst_44 = arith.constant dense<0.000000e+00> : vector<2x256xf32>
    %185 = tpu.matmul %183, %16, %cst_44 {dimension_numbers = #tpu.dot_dimension_numbers<[1], [0], [0], [1], [0, 0, 1, 1], [], []>} : vector<2x64xbf16>, vector<64x256xbf16>, vector<2x256xf32> -> vector<2x256xf32>
    %186 = arith.addf %39, %184 : vector<2x256xf32>
    %187 = arith.addf %38, %185 : vector<2x256xf32>
    %188 = vector.extract_strided_slice %182 {offsets = [0, 0], sizes = [2, 32], strides = [1, 1]} : vector<2x64xf32> to vector<2x32xf32>
    %189 = vector.extract_strided_slice %182 {offsets = [0, 32], sizes = [2, 32], strides = [1, 1]} : vector<2x64xf32> to vector<2x32xf32>
    %c0_45 = arith.constant 0 : index
    %c0_46 = arith.constant 0 : index
    %190 = vector.load %arg5[%c0_45, %c0_46] : memref<1x256xf32, #tpu.memory_space<vmem>>, vector<1x256xf32>
    %191 = vector.broadcast %190 : vector<1x256xf32> to vector<2x256xf32>
    %192 = arith.addf %187, %191 : vector<2x256xf32>
    %193 = vector.broadcast %190 : vector<1x256xf32> to vector<2x256xf32>
    %194 = arith.addf %165, %193 : vector<2x256xf32>
    %195 = vector.broadcast %190 : vector<1x256xf32> to vector<2x256xf32>
    %196 = arith.addf %143, %195 : vector<2x256xf32>
    %197 = vector.broadcast %190 : vector<1x256xf32> to vector<2x256xf32>
    %198 = arith.addf %121, %197 : vector<2x256xf32>
    %199 = vector.broadcast %190 : vector<1x256xf32> to vector<2x256xf32>
    %200 = arith.addf %120, %199 : vector<2x256xf32>
    %201 = vector.broadcast %190 : vector<1x256xf32> to vector<2x256xf32>
    %202 = arith.addf %142, %201 : vector<2x256xf32>
    %203 = vector.broadcast %190 : vector<1x256xf32> to vector<2x256xf32>
    %204 = arith.addf %164, %203 : vector<2x256xf32>
    %205 = vector.broadcast %190 : vector<1x256xf32> to vector<2x256xf32>
    %206 = arith.addf %186, %205 : vector<2x256xf32>
    %c0_47 = arith.constant 0 : index
    %c0_48 = arith.constant 0 : index
    %207 = vector.load %arg4[%c0_47, %c0_48] : memref<64x256xbf16, #tpu.memory_space<vmem>>, vector<64x256xbf16>
    %cst_49 = arith.constant 0.000000e+00 : f32
    %208 = vector.broadcast %cst_49 : f32 to vector<2x64xf32>
    %cst_50 = arith.constant 0.000000e+00 : f32
    %209 = vector.broadcast %cst_50 : f32 to vector<2x64xf32>
    %210 = arith.truncf %208 : vector<2x64xf32> to vector<2x64xbf16>
    %cst_51 = arith.constant dense<0.000000e+00> : vector<2x256xf32>
    %211 = tpu.matmul %210, %207, %cst_51 {dimension_numbers = #tpu.dot_dimension_numbers<[1], [0], [0], [1], [0, 0, 1, 1], [], []>} : vector<2x64xbf16>, vector<64x256xbf16>, vector<2x256xf32> -> vector<2x256xf32>
    %212 = arith.addf %192, %211 : vector<2x256xf32>
    %213 = arith.negf %212 : vector<2x256xf32>
    %214 = math.exp %213 : vector<2x256xf32>
    %cst_52 = arith.constant 1.000000e+00 : f32
    %215 = vector.broadcast %cst_52 : f32 to vector<2x256xf32>
    %216 = arith.addf %215, %214 : vector<2x256xf32>
    %217 = arith.divf %215, %216 : vector<2x256xf32>
    %218 = vector.extract_strided_slice %217 {offsets = [0, 0], sizes = [2, 64], strides = [1, 1]} : vector<2x256xf32> to vector<2x64xf32>
    %219 = vector.extract_strided_slice %217 {offsets = [0, 64], sizes = [2, 64], strides = [1, 1]} : vector<2x256xf32> to vector<2x64xf32>
    %220 = vector.extract_strided_slice %217 {offsets = [0, 192], sizes = [2, 64], strides = [1, 1]} : vector<2x256xf32> to vector<2x64xf32>
    %221 = vector.extract_strided_slice %212 {offsets = [0, 128], sizes = [2, 64], strides = [1, 1]} : vector<2x256xf32> to vector<2x64xf32>
    %222 = math.tanh %221 : vector<2x64xf32>
    %223 = arith.mulf %219, %209 : vector<2x64xf32>
    %224 = arith.mulf %218, %222 : vector<2x64xf32>
    %225 = arith.addf %223, %224 : vector<2x64xf32>
    %226 = math.tanh %225 : vector<2x64xf32>
    %227 = arith.mulf %220, %226 : vector<2x64xf32>
    %228 = arith.truncf %227 : vector<2x64xf32> to vector<2x64xbf16>
    %cst_53 = arith.constant dense<0.000000e+00> : vector<2x256xf32>
    %229 = tpu.matmul %228, %207, %cst_53 {dimension_numbers = #tpu.dot_dimension_numbers<[1], [0], [0], [1], [0, 0, 1, 1], [], []>} : vector<2x64xbf16>, vector<64x256xbf16>, vector<2x256xf32> -> vector<2x256xf32>
    %230 = arith.addf %194, %229 : vector<2x256xf32>
    %231 = arith.negf %230 : vector<2x256xf32>
    %232 = math.exp %231 : vector<2x256xf32>
    %cst_54 = arith.constant 1.000000e+00 : f32
    %233 = vector.broadcast %cst_54 : f32 to vector<2x256xf32>
    %234 = arith.addf %233, %232 : vector<2x256xf32>
    %235 = arith.divf %233, %234 : vector<2x256xf32>
    %236 = vector.extract_strided_slice %235 {offsets = [0, 0], sizes = [2, 64], strides = [1, 1]} : vector<2x256xf32> to vector<2x64xf32>
    %237 = vector.extract_strided_slice %235 {offsets = [0, 64], sizes = [2, 64], strides = [1, 1]} : vector<2x256xf32> to vector<2x64xf32>
    %238 = vector.extract_strided_slice %235 {offsets = [0, 192], sizes = [2, 64], strides = [1, 1]} : vector<2x256xf32> to vector<2x64xf32>
    %239 = vector.extract_strided_slice %230 {offsets = [0, 128], sizes = [2, 64], strides = [1, 1]} : vector<2x256xf32> to vector<2x64xf32>
    %240 = math.tanh %239 : vector<2x64xf32>
    %241 = arith.mulf %237, %225 : vector<2x64xf32>
    %242 = arith.mulf %236, %240 : vector<2x64xf32>
    %243 = arith.addf %241, %242 : vector<2x64xf32>
    %244 = math.tanh %243 : vector<2x64xf32>
    %245 = arith.mulf %238, %244 : vector<2x64xf32>
    %246 = arith.truncf %245 : vector<2x64xf32> to vector<2x64xbf16>
    %cst_55 = arith.constant dense<0.000000e+00> : vector<2x256xf32>
    %247 = tpu.matmul %246, %207, %cst_55 {dimension_numbers = #tpu.dot_dimension_numbers<[1], [0], [0], [1], [0, 0, 1, 1], [], []>} : vector<2x64xbf16>, vector<64x256xbf16>, vector<2x256xf32> -> vector<2x256xf32>
    %248 = arith.addf %196, %247 : vector<2x256xf32>
    %249 = arith.negf %248 : vector<2x256xf32>
    %250 = math.exp %249 : vector<2x256xf32>
    %cst_56 = arith.constant 1.000000e+00 : f32
    %251 = vector.broadcast %cst_56 : f32 to vector<2x256xf32>
    %252 = arith.addf %251, %250 : vector<2x256xf32>
    %253 = arith.divf %251, %252 : vector<2x256xf32>
    %254 = vector.extract_strided_slice %253 {offsets = [0, 0], sizes = [2, 64], strides = [1, 1]} : vector<2x256xf32> to vector<2x64xf32>
    %255 = vector.extract_strided_slice %253 {offsets = [0, 64], sizes = [2, 64], strides = [1, 1]} : vector<2x256xf32> to vector<2x64xf32>
    %256 = vector.extract_strided_slice %253 {offsets = [0, 192], sizes = [2, 64], strides = [1, 1]} : vector<2x256xf32> to vector<2x64xf32>
    %257 = vector.extract_strided_slice %248 {offsets = [0, 128], sizes = [2, 64], strides = [1, 1]} : vector<2x256xf32> to vector<2x64xf32>
    %258 = math.tanh %257 : vector<2x64xf32>
    %259 = arith.mulf %255, %243 : vector<2x64xf32>
    %260 = arith.mulf %254, %258 : vector<2x64xf32>
    %261 = arith.addf %259, %260 : vector<2x64xf32>
    %262 = math.tanh %261 : vector<2x64xf32>
    %263 = arith.mulf %256, %262 : vector<2x64xf32>
    %264 = arith.truncf %263 : vector<2x64xf32> to vector<2x64xbf16>
    %cst_57 = arith.constant dense<0.000000e+00> : vector<2x256xf32>
    %265 = tpu.matmul %264, %207, %cst_57 {dimension_numbers = #tpu.dot_dimension_numbers<[1], [0], [0], [1], [0, 0, 1, 1], [], []>} : vector<2x64xbf16>, vector<64x256xbf16>, vector<2x256xf32> -> vector<2x256xf32>
    %266 = arith.addf %198, %265 : vector<2x256xf32>
    %267 = arith.negf %266 : vector<2x256xf32>
    %268 = math.exp %267 : vector<2x256xf32>
    %cst_58 = arith.constant 1.000000e+00 : f32
    %269 = vector.broadcast %cst_58 : f32 to vector<2x256xf32>
    %270 = arith.addf %269, %268 : vector<2x256xf32>
    %271 = arith.divf %269, %270 : vector<2x256xf32>
    %272 = vector.extract_strided_slice %271 {offsets = [0, 0], sizes = [2, 64], strides = [1, 1]} : vector<2x256xf32> to vector<2x64xf32>
    %273 = vector.extract_strided_slice %271 {offsets = [0, 64], sizes = [2, 64], strides = [1, 1]} : vector<2x256xf32> to vector<2x64xf32>
    %274 = vector.extract_strided_slice %271 {offsets = [0, 192], sizes = [2, 64], strides = [1, 1]} : vector<2x256xf32> to vector<2x64xf32>
    %275 = vector.extract_strided_slice %266 {offsets = [0, 128], sizes = [2, 64], strides = [1, 1]} : vector<2x256xf32> to vector<2x64xf32>
    %276 = math.tanh %275 : vector<2x64xf32>
    %277 = arith.mulf %273, %261 : vector<2x64xf32>
    %278 = arith.mulf %272, %276 : vector<2x64xf32>
    %279 = arith.addf %277, %278 : vector<2x64xf32>
    %280 = math.tanh %279 : vector<2x64xf32>
    %281 = arith.mulf %274, %280 : vector<2x64xf32>
    %282 = arith.truncf %281 : vector<2x64xf32> to vector<2x64xbf16>
    %cst_59 = arith.constant dense<0.000000e+00> : vector<2x256xf32>
    %283 = tpu.matmul %282, %207, %cst_59 {dimension_numbers = #tpu.dot_dimension_numbers<[1], [0], [0], [1], [0, 0, 1, 1], [], []>} : vector<2x64xbf16>, vector<64x256xbf16>, vector<2x256xf32> -> vector<2x256xf32>
    %284 = arith.addf %200, %283 : vector<2x256xf32>
    %285 = arith.negf %284 : vector<2x256xf32>
    %286 = math.exp %285 : vector<2x256xf32>
    %cst_60 = arith.constant 1.000000e+00 : f32
    %287 = vector.broadcast %cst_60 : f32 to vector<2x256xf32>
    %288 = arith.addf %287, %286 : vector<2x256xf32>
    %289 = arith.divf %287, %288 : vector<2x256xf32>
    %290 = vector.extract_strided_slice %289 {offsets = [0, 0], sizes = [2, 64], strides = [1, 1]} : vector<2x256xf32> to vector<2x64xf32>
    %291 = vector.extract_strided_slice %289 {offsets = [0, 64], sizes = [2, 64], strides = [1, 1]} : vector<2x256xf32> to vector<2x64xf32>
    %292 = vector.extract_strided_slice %289 {offsets = [0, 192], sizes = [2, 64], strides = [1, 1]} : vector<2x256xf32> to vector<2x64xf32>
    %293 = vector.extract_strided_slice %284 {offsets = [0, 128], sizes = [2, 64], strides = [1, 1]} : vector<2x256xf32> to vector<2x64xf32>
    %294 = math.tanh %293 : vector<2x64xf32>
    %295 = arith.mulf %291, %279 : vector<2x64xf32>
    %296 = arith.mulf %290, %294 : vector<2x64xf32>
    %297 = arith.addf %295, %296 : vector<2x64xf32>
    %298 = math.tanh %297 : vector<2x64xf32>
    %299 = arith.mulf %292, %298 : vector<2x64xf32>
    %300 = arith.truncf %299 : vector<2x64xf32> to vector<2x64xbf16>
    %cst_61 = arith.constant dense<0.000000e+00> : vector<2x256xf32>
    %301 = tpu.matmul %300, %207, %cst_61 {dimension_numbers = #tpu.dot_dimension_numbers<[1], [0], [0], [1], [0, 0, 1, 1], [], []>} : vector<2x64xbf16>, vector<64x256xbf16>, vector<2x256xf32> -> vector<2x256xf32>
    %302 = arith.addf %202, %301 : vector<2x256xf32>
    %303 = arith.negf %302 : vector<2x256xf32>
    %304 = math.exp %303 : vector<2x256xf32>
    %cst_62 = arith.constant 1.000000e+00 : f32
    %305 = vector.broadcast %cst_62 : f32 to vector<2x256xf32>
    %306 = arith.addf %305, %304 : vector<2x256xf32>
    %307 = arith.divf %305, %306 : vector<2x256xf32>
    %308 = vector.extract_strided_slice %307 {offsets = [0, 0], sizes = [2, 64], strides = [1, 1]} : vector<2x256xf32> to vector<2x64xf32>
    %309 = vector.extract_strided_slice %307 {offsets = [0, 64], sizes = [2, 64], strides = [1, 1]} : vector<2x256xf32> to vector<2x64xf32>
    %310 = vector.extract_strided_slice %307 {offsets = [0, 192], sizes = [2, 64], strides = [1, 1]} : vector<2x256xf32> to vector<2x64xf32>
    %311 = vector.extract_strided_slice %302 {offsets = [0, 128], sizes = [2, 64], strides = [1, 1]} : vector<2x256xf32> to vector<2x64xf32>
    %312 = math.tanh %311 : vector<2x64xf32>
    %313 = arith.mulf %309, %297 : vector<2x64xf32>
    %314 = arith.mulf %308, %312 : vector<2x64xf32>
    %315 = arith.addf %313, %314 : vector<2x64xf32>
    %316 = math.tanh %315 : vector<2x64xf32>
    %317 = arith.mulf %310, %316 : vector<2x64xf32>
    %318 = arith.truncf %317 : vector<2x64xf32> to vector<2x64xbf16>
    %cst_63 = arith.constant dense<0.000000e+00> : vector<2x256xf32>
    %319 = tpu.matmul %318, %207, %cst_63 {dimension_numbers = #tpu.dot_dimension_numbers<[1], [0], [0], [1], [0, 0, 1, 1], [], []>} : vector<2x64xbf16>, vector<64x256xbf16>, vector<2x256xf32> -> vector<2x256xf32>
    %320 = arith.addf %204, %319 : vector<2x256xf32>
    %321 = arith.negf %320 : vector<2x256xf32>
    %322 = math.exp %321 : vector<2x256xf32>
    %cst_64 = arith.constant 1.000000e+00 : f32
    %323 = vector.broadcast %cst_64 : f32 to vector<2x256xf32>
    %324 = arith.addf %323, %322 : vector<2x256xf32>
    %325 = arith.divf %323, %324 : vector<2x256xf32>
    %326 = vector.extract_strided_slice %325 {offsets = [0, 0], sizes = [2, 64], strides = [1, 1]} : vector<2x256xf32> to vector<2x64xf32>
    %327 = vector.extract_strided_slice %325 {offsets = [0, 64], sizes = [2, 64], strides = [1, 1]} : vector<2x256xf32> to vector<2x64xf32>
    %328 = vector.extract_strided_slice %325 {offsets = [0, 192], sizes = [2, 64], strides = [1, 1]} : vector<2x256xf32> to vector<2x64xf32>
    %329 = vector.extract_strided_slice %320 {offsets = [0, 128], sizes = [2, 64], strides = [1, 1]} : vector<2x256xf32> to vector<2x64xf32>
    %330 = math.tanh %329 : vector<2x64xf32>
    %331 = arith.mulf %327, %315 : vector<2x64xf32>
    %332 = arith.mulf %326, %330 : vector<2x64xf32>
    %333 = arith.addf %331, %332 : vector<2x64xf32>
    %334 = math.tanh %333 : vector<2x64xf32>
    %335 = arith.mulf %328, %334 : vector<2x64xf32>
    %336 = arith.truncf %335 : vector<2x64xf32> to vector<2x64xbf16>
    %cst_65 = arith.constant dense<0.000000e+00> : vector<2x256xf32>
    %337 = tpu.matmul %336, %207, %cst_65 {dimension_numbers = #tpu.dot_dimension_numbers<[1], [0], [0], [1], [0, 0, 1, 1], [], []>} : vector<2x64xbf16>, vector<64x256xbf16>, vector<2x256xf32> -> vector<2x256xf32>
    %338 = arith.addf %206, %337 : vector<2x256xf32>
    %339 = arith.negf %338 : vector<2x256xf32>
    %340 = math.exp %339 : vector<2x256xf32>
    %cst_66 = arith.constant 1.000000e+00 : f32
    %341 = vector.broadcast %cst_66 : f32 to vector<2x256xf32>
    %342 = arith.addf %341, %340 : vector<2x256xf32>
    %343 = arith.divf %341, %342 : vector<2x256xf32>
    %344 = vector.extract_strided_slice %343 {offsets = [0, 0], sizes = [2, 64], strides = [1, 1]} : vector<2x256xf32> to vector<2x64xf32>
    %345 = vector.extract_strided_slice %343 {offsets = [0, 64], sizes = [2, 64], strides = [1, 1]} : vector<2x256xf32> to vector<2x64xf32>
    %346 = vector.extract_strided_slice %343 {offsets = [0, 192], sizes = [2, 64], strides = [1, 1]} : vector<2x256xf32> to vector<2x64xf32>
    %347 = vector.extract_strided_slice %338 {offsets = [0, 128], sizes = [2, 64], strides = [1, 1]} : vector<2x256xf32> to vector<2x64xf32>
    %348 = math.tanh %347 : vector<2x64xf32>
    %349 = arith.mulf %345, %333 : vector<2x64xf32>
    %350 = arith.mulf %344, %348 : vector<2x64xf32>
    %351 = arith.addf %349, %350 : vector<2x64xf32>
    %352 = math.tanh %351 : vector<2x64xf32>
    %353 = arith.mulf %346, %352 : vector<2x64xf32>
    %354 = vector.extract_strided_slice %353 {offsets = [0, 0], sizes = [2, 32], strides = [1, 1]} : vector<2x64xf32> to vector<2x32xf32>
    %355 = vector.extract_strided_slice %353 {offsets = [0, 32], sizes = [2, 32], strides = [1, 1]} : vector<2x64xf32> to vector<2x32xf32>
    %356 = vector.extract_strided_slice %188 {offsets = [0, 0], sizes = [1, 32], strides = [1, 1]} : vector<2x32xf32> to vector<1x32xf32>
    %357 = vector.extract_strided_slice %188 {offsets = [1, 0], sizes = [1, 32], strides = [1, 1]} : vector<2x32xf32> to vector<1x32xf32>
    %358 = tpu.concatenate %356, %357 in 1 : vector<1x32xf32>, vector<1x32xf32> -> vector<1x64xf32>
    %359 = vector.extract_strided_slice %189 {offsets = [0, 0], sizes = [1, 32], strides = [1, 1]} : vector<2x32xf32> to vector<1x32xf32>
    %360 = vector.extract_strided_slice %189 {offsets = [1, 0], sizes = [1, 32], strides = [1, 1]} : vector<2x32xf32> to vector<1x32xf32>
    %361 = tpu.concatenate %359, %360 in 1 : vector<1x32xf32>, vector<1x32xf32> -> vector<1x64xf32>
    %362 = vector.extract_strided_slice %354 {offsets = [0, 0], sizes = [1, 32], strides = [1, 1]} : vector<2x32xf32> to vector<1x32xf32>
    %363 = vector.extract_strided_slice %354 {offsets = [1, 0], sizes = [1, 32], strides = [1, 1]} : vector<2x32xf32> to vector<1x32xf32>
    %364 = tpu.concatenate %362, %363 in 1 : vector<1x32xf32>, vector<1x32xf32> -> vector<1x64xf32>
    %365 = vector.extract_strided_slice %355 {offsets = [0, 0], sizes = [1, 32], strides = [1, 1]} : vector<2x32xf32> to vector<1x32xf32>
    %366 = vector.extract_strided_slice %355 {offsets = [1, 0], sizes = [1, 32], strides = [1, 1]} : vector<2x32xf32> to vector<1x32xf32>
    %367 = tpu.concatenate %365, %366 in 1 : vector<1x32xf32>, vector<1x32xf32> -> vector<1x64xf32>
    %368 = tpu.concatenate %358, %361, %364, %367 in 0 : vector<1x64xf32>, vector<1x64xf32>, vector<1x64xf32>, vector<1x64xf32> -> vector<4x64xf32>
    %cst_67 = arith.constant 0.000000e+00 : f32
    %369 = vector.broadcast %cst_67 : f32 to vector<4x64xf32>
    %370 = arith.maximumf %368, %369 : vector<4x64xf32>
    %c0_68 = arith.constant 0 : index
    %c0_69 = arith.constant 0 : index
    %371 = vector.load %arg8[%c0_68, %c0_69] : memref<64x5xf32, #tpu.memory_space<vmem>>, vector<64x5xf32>
    %cst_70 = arith.constant dense<0.000000e+00> : vector<4x5xf32>
    %372 = tpu.matmul %370, %371, %cst_70 {dimension_numbers = #tpu.dot_dimension_numbers<[1], [0], [0], [1], [0, 0, 1, 1], [], []>} : vector<4x64xf32>, vector<64x5xf32>, vector<4x5xf32> -> vector<4x5xf32>
    %c0_71 = arith.constant 0 : index
    %c0_72 = arith.constant 0 : index
    %373 = vector.load %arg9[%c0_71, %c0_72] : memref<1x5xf32, #tpu.memory_space<vmem>>, vector<1x5xf32>
    %374 = vector.broadcast %373 : vector<1x5xf32> to vector<4x5xf32>
    %375 = arith.addf %372, %374 : vector<4x5xf32>
    %cst_73 = arith.constant dense<0xFF800000> : vector<4xf32>
    %376 = vector.multi_reduction <maximumf>, %375, %cst_73 [1] : vector<4x5xf32> to vector<4xf32>
    %377 = vector.shape_cast %376 : vector<4xf32> to vector<4x1xf32>
    %378 = vector.broadcast %377 : vector<4x1xf32> to vector<4x5xf32>
    %379 = arith.subf %375, %378 : vector<4x5xf32>
    %380 = math.exp %379 : vector<4x5xf32>
    %cst_74 = arith.constant dense<0.000000e+00> : vector<4xf32>
    %381 = vector.multi_reduction <add>, %380, %cst_74 [1] : vector<4x5xf32> to vector<4xf32>
    %382 = vector.shape_cast %381 : vector<4xf32> to vector<4x1xf32>
    %383 = vector.broadcast %382 : vector<4x1xf32> to vector<4x5xf32>
    %384 = arith.divf %380, %383 : vector<4x5xf32>
    %c0_75 = arith.constant 0 : index
    %c0_76 = arith.constant 0 : index
    %385 = vector.load %arg10[%c0_75, %c0_76] : memref<4x5xf32, #tpu.memory_space<vmem>>, vector<4x5xf32>
    tpu.vector_store %arg10[%c0_75, %c0_76], %384 {strides = array<i32>} : memref<4x5xf32, #tpu.memory_space<vmem>>, vector<4x5xf32>,
    return
  }
}

</mosaic_0001>

<llo_original>
// kernel: variable_lstm_net_forward.1
$region0: #{variable_lstm_net_forward.1}
  #allocation0 [shape = 'u32[]', space=smem, size = 0x4, offset = 0x4, fixed_abs, tag = 'smem constant byte address 0x4 - core index']
  #allocation1 [shape = 'u32[144,128]{1,0:T(1,128)}', space=vmem, size = 0x12000, scoped, tag = 'internal scratch']
  %s0 = inlined_call_operand.vmem [shape: bf16[16,32], index: 0, kind: input, shape index: {}]
  %s1 = inlined_call_operand.vmem [shape: bf16[32,256], index: 1, kind: input, shape index: {}]
  %s2 = inlined_call_operand.vmem [shape: bf16[64,256], index: 2, kind: input, shape index: {}]
  %s3 = inlined_call_operand.vmem [shape: f32[1,256], index: 3, kind: input, shape index: {}]
  %s4 = inlined_call_operand.vmem [shape: bf16[64,256], index: 4, kind: input, shape index: {}]
  %s5 = inlined_call_operand.vmem [shape: f32[1,256], index: 5, kind: input, shape index: {}]
  %s6 = inlined_call_operand.hbm [shape: bf16[64,256], index: 6, kind: input, shape index: {}]
  %s7 = inlined_call_operand.hbm [shape: bf16[64,256], index: 7, kind: input, shape index: {}]
  %s8 = inlined_call_operand.vmem [shape: f32[64,5], index: 8, kind: input, shape index: {}]
  %s9 = inlined_call_operand.vmem [shape: f32[1,5], index: 9, kind: input, shape index: {}]
  %s10 = inlined_call_operand.hbm [shape: f32[4,5], index: 10, kind: output, shape index: {}]
  %s11 = sld [smem:[#allocation0]]
  $region58: #{variable_lstm_net_forward.1} parent=0
    _
  %s13 = ssub.s32 1, %s11
  %s14 = scalar_select 0, %s13, %s11
  $region1: #{variable_lstm_net_forward.1} parent=0
    #allocation2 [shape = 'u8[32768]{0}', space=vmem, size = 0x8000, scoped, tag = 'input window, operand 6, single buffered']
    #allocation3 [shape = 's32[1]{0}', space=sflag, size = 0x4, scoped, tag = 'scoped memory for variable_lstm_net_forward.1']
    #allocation4 [shape = 's32[1]{0}', space=sflag, size = 0x4, scoped, tag = 'scoped memory for variable_lstm_net_forward.1']
    #allocation5 [shape = 'u8[32768]{0}', space=vmem, size = 0x8000, scoped, tag = 'input window, operand 7, single buffered']
    #allocation6 [shape = 's32[1]{0}', space=sflag, size = 0x4, scoped, tag = 'scoped memory for variable_lstm_net_forward.1']
    #allocation7 [shape = 'u8[2048]{0}', space=vmem, size = 0x800, scoped, tag = 'output window, operand 0, single buffered']
    %15 = vsyncpa [#allocation3], 0
    %16 = vsyncpa [#allocation6], 0
    %17 = vsyncpa [#allocation4], 0
    // Predicated region
    $region2: #{variable_lstm_net_forward.1} parent=1 // pred_check
      _
    $region3: #{variable_lstm_net_forward.1} parent=1 // pred_check_branch
      %19 = sbr.rel (0) target = $region5
    $region4: #{variable_lstm_net_forward.1} parent=1 // pred_region
      _
    $region5: #{variable_lstm_net_forward.1} parent=1 // pred_fallthru
      _
    // Predicated region
    $region6: #{variable_lstm_net_forward.1} parent=1 // pred_check
      _
    $region7: #{variable_lstm_net_forward.1} parent=1 // pred_check_branch
      %21 = sbr.rel (0) target = $region9
    $region8: #{variable_lstm_net_forward.1} parent=1 // pred_region
      _
    $region9: #{variable_lstm_net_forward.1} parent=1 // pred_fallthru
      _
    // Predicated region
    $region10: #{variable_lstm_net_forward.1} parent=1 // pred_check
      _
    $region11: #{variable_lstm_net_forward.1} parent=1 // pred_check_branch
      %23 = sbr.rel (0) target = $region13
    $region12: #{variable_lstm_net_forward.1} parent=1 // pred_region
      _
    $region13: #{variable_lstm_net_forward.1} parent=1 // pred_fallthru
      _
    // Predicated region
    $region14: #{variable_lstm_net_forward.1} parent=1 // pred_check
      _
    $region15: #{variable_lstm_net_forward.1} parent=1 // pred_check_branch
      %25 = sbr.rel (0) target = $region17
    $region16: #{variable_lstm_net_forward.1} parent=1 // pred_region
      _
    $region17: #{variable_lstm_net_forward.1} parent=1 // pred_fallthru
      _
    // Predicated region
    $region18: #{variable_lstm_net_forward.1} parent=1 // pred_check
      _
    $region19: #{variable_lstm_net_forward.1} parent=1 // pred_check_branch
      %27 = sbr.rel (0) target = $region21
    $region20: #{variable_lstm_net_forward.1} parent=1 // pred_region
      _
    $region21: #{variable_lstm_net_forward.1} parent=1 // pred_fallthru
      _
    // Predicated region
    $region22: #{variable_lstm_net_forward.1} parent=1 // pred_check
      _
    $region23: #{variable_lstm_net_forward.1} parent=1 // pred_check_branch
      %29 = sbr.rel (0) target = $region25
    $region24: #{variable_lstm_net_forward.1} parent=1 // pred_region
      _
    $region25: #{variable_lstm_net_forward.1} parent=1 // pred_fallthru
      _
    // Predicated region
    $region26: #{variable_lstm_net_forward.1} parent=1 // pred_check
      _
    $region27: #{variable_lstm_net_forward.1} parent=1 // pred_check_branch
      %31 = sbr.rel (0) target = $region29
    $region28: #{variable_lstm_net_forward.1} parent=1 // pred_region
      %s33 = ssub.s32 1024, 1024
      %34 = vsyncadd [#allocation3], %s33
      %s35 = sshll.u32 [#allocation2], 4
      %s36 = int_to_ptr.vmem [resolvable:$true] %s35
      %41 = dma.hbm_to_vmem [thread:$0]  %s6, 1024, %s36, [#allocation3], 128, 128, 8
    $region29: #{variable_lstm_net_forward.1} parent=1 // pred_fallthru
      _
    // Predicated region
    $region30: #{variable_lstm_net_forward.1} parent=1 // pred_check
      _
    $region31: #{variable_lstm_net_forward.1} parent=1 // pred_check_branch
      %43 = sbr.rel (0) target = $region33
    $region32: #{variable_lstm_net_forward.1} parent=1 // pred_region
      %s45 = ssub.s32 1024, 1024
      %46 = vsyncadd [#allocation6], %s45
      %s47 = sshll.u32 [#allocation5], 4
      %s48 = int_to_ptr.vmem [resolvable:$true] %s47
      %53 = dma.hbm_to_vmem [thread:$0]  %s7, 1024, %s48, [#allocation6], 128, 128, 8
    $region33: #{variable_lstm_net_forward.1} parent=1 // pred_fallthru
      _
    // Predicated region
    $region34: #{variable_lstm_net_forward.1} parent=1 // pred_check
      _
    $region35: #{variable_lstm_net_forward.1} parent=1 // pred_check_branch
      %55 = sbr.rel (0) target = $region37
    $region36: #{variable_lstm_net_forward.1} parent=1 // pred_region
      _
    $region37: #{variable_lstm_net_forward.1} parent=1 // pred_fallthru
      _
    // Predicated region
    $region38: #{variable_lstm_net_forward.1} parent=1 // pred_check
      _
    $region39: #{variable_lstm_net_forward.1} parent=1 // pred_check_branch
      %57 = sbr.rel (0) target = $region41
    $region40: #{variable_lstm_net_forward.1} parent=1 // pred_region
      _
    $region41: #{variable_lstm_net_forward.1} parent=1 // pred_fallthru
      _
    // Predicated region
    $region42: #{variable_lstm_net_forward.1} parent=1 // pred_check
      _
    $region43: #{variable_lstm_net_forward.1} parent=1 // pred_check_branch
      %59 = sbr.rel (0) target = $region45
    $region44: #{variable_lstm_net_forward.1} parent=1 // pred_region
      %60 = dma.done [#allocation3], 1024
    $region45: #{variable_lstm_net_forward.1} parent=1 // pred_fallthru
      _
    // Predicated region
    $region46: #{variable_lstm_net_forward.1} parent=1 // pred_check
      _
    $region47: #{variable_lstm_net_forward.1} parent=1 // pred_check_branch
      %62 = sbr.rel (0) target = $region49
    $region48: #{variable_lstm_net_forward.1} parent=1 // pred_region
      %63 = dma.done [#allocation6], 1024
    $region49: #{variable_lstm_net_forward.1} parent=1 // pred_fallthru
      _
    %v65 = vld [vmem:[%s0] sm:$0xf]
    %v66 = vld [vmem:[%s0 + $0x4] sm:$0xf]
    %v67 = vld [vmem:[%s1] sm:$0xff]
    %v68 = vld [vmem:[%s1 + $0x8] sm:$0xff]
    %v69 = vld [vmem:[%s1 + $0x10] sm:$0xff]
    %v70 = vld [vmem:[%s1 + $0x18] sm:$0xff]
    %v71 = vld [vmem:[%s3] sm:$0x3]
    %v73 = vlaneseq
    %v74 = vshrl.u32 %v73, 7
    %v75 = vsub.s32 0, %v74
    %v76 = vrot.slane %v71, %v75
    %v77 = vlaneseq
    %v78 = vshrl.u32 %v77, 7
    %v79 = vsub.s32 1, %v78
    %v80 = vrot.slane %v71, %v79
    %v85 = vunpack.c.l.b16 %v65
    %v86 = vunpack.c.l.b16 %v66
    %v87 = vpack.c.b16 %v86, %v85
    %v92 = vunpack.c.l.b16 %v67
    %v93 = vunpack.c.h.b16 %v67
    %v94 = vunpack.c.l.b16 %v68
    %v95 = vunpack.c.h.b16 %v68
    %v96 = vunpack.c.l.b16 %v69
    %v97 = vunpack.c.h.b16 %v69
    %v98 = vunpack.c.l.b16 %v70
    %v99 = vunpack.c.h.b16 %v70
    %v100 = vpack.c.b16 %v94, %v92
    %v101 = vpack.c.b16 %v95, %v93
    %v102 = vpack.c.b16 %v98, %v96
    %v103 = vpack.c.b16 %v99, %v97
    %vm108 = vcmask 261120
    %v110 = vsel %vm108, %v87, 0
    %112 = vmatprep.subr.bf16.mxu0 0
    %113 = vmatpush1.bf16.msra.mxu0 0
    %114 = vmatprep.subr.bf16.mxu0 0
    %115 = vmatpush1.bf16.msra.mxu0 0
    %116 = vmatprep.subr.bf16.mxu0 0
    %117 = vmatpush1.bf16.msra.mxu0 0
    %118 = vmatprep.subr.bf16.mxu0 0
    %119 = vmatpush1.bf16.msra.mxu0 0
    %120 = vmatprep.subr.bf16.mxu0 0
    %121 = vmatpush1.bf16.msra.mxu0 0
    %122 = vmatprep.subr.bf16.mxu0 0
    %123 = vmatpush1.bf16.msra.mxu0 0
    %124 = vmatprep.subr.bf16.mxu0 %v103
    %125 = vmatpush1.bf16.msra.mxu0 %v102
    %126 = vmatprep.subr.bf16.mxu0 %v101
    %127 = vmatpush1.bf16.msra.mxu0 %v100
    %128 = vmatprep.subr.bf16.mxu0 0
    %129 = vmatpush2.bf16.msra.mxu0 0
    %130 = vmatprep.subr.bf16.mxu0 0
    %131 = vmatpush2.bf16.msra.mxu0 0
    %132 = vmatprep.subr.bf16.mxu0 0
    %133 = vmatpush2.bf16.msra.mxu0 0
    %134 = vmatprep.subr.bf16.mxu0 0
    %135 = vmatpush2.bf16.msra.mxu0 0
    %136 = vmatprep.subr.bf16.mxu0 0
    %137 = vmatpush2.bf16.msra.mxu0 0
    %138 = vmatprep.subr.bf16.mxu0 0
    %139 = vmatpush2.bf16.msra.mxu0 0
    %140 = vmatprep.subr.bf16.mxu0 0
    %141 = vmatpush2.bf16.msra.mxu0 0
    %142 = vmatprep.subr.bf16.mxu0 0
    %143 = vmatpush2.bf16.msra.mxu0 0
    %144 = vmatprep.mubr.bf16.mxu0 0
    %145 = vmatmul.mubr.bf16.gmra.mxu0 %v110
    %v146 = vpop.f32.mrf.mxu0
    %v147 = vadd.f32 %v76, %v146
    %v148 = vpop.f32.mrf.mxu0
    %v149 = vadd.f32 %v80, %v148
    %v150 = vpop.f32.mrf.mxu0
    %v151 = vadd.f32 %v76, %v150
    %v152 = vpop.f32.mrf.mxu0
    %v153 = vadd.f32 %v80, %v152
    %154 = vdwg.mxu0
    %v155 = vld [vmem:[%s2] sm:$0xff]
    %v156 = vld [vmem:[%s2 + $0x8] sm:$0xff]
    %v157 = vld [vmem:[%s2 + $0x10] sm:$0xff]
    %v158 = vld [vmem:[%s2 + $0x18] sm:$0xff]
    %v159 = vld [vmem:[%s2 + $0x20] sm:$0xff]
    %v160 = vld [vmem:[%s2 + $0x28] sm:$0xff]
    %v161 = vld [vmem:[%s2 + $0x30] sm:$0xff]
    %v162 = vld [vmem:[%s2 + $0x38] sm:$0xff]
    %v163 = vld [vmem:[#allocation2] sm:$0xff]
    %v164 = vld [vmem:[#allocation2 + $0x8] sm:$0xff]
    %v165 = vld [vmem:[#allocation2 + $0x10] sm:$0xff]
    %v166 = vld [vmem:[#allocation2 + $0x18] sm:$0xff]
    %v167 = vld [vmem:[#allocation2 + $0x20] sm:$0xff]
    %v168 = vld [vmem:[#allocation2 + $0x28] sm:$0xff]
    %v169 = vld [vmem:[#allocation2 + $0x30] sm:$0xff]
    %v170 = vld [vmem:[#allocation2 + $0x38] sm:$0xff]
    %v171 = vld [vmem:[#allocation5] sm:$0xff]
    %v172 = vld [vmem:[#allocation5 + $0x8] sm:$0xff]
    %v173 = vld [vmem:[#allocation5 + $0x10] sm:$0xff]
    %v174 = vld [vmem:[#allocation5 + $0x18] sm:$0xff]
    %v175 = vld [vmem:[#allocation5 + $0x20] sm:$0xff]
    %v176 = vld [vmem:[#allocation5 + $0x28] sm:$0xff]
    %v177 = vld [vmem:[#allocation5 + $0x30] sm:$0xff]
    %v178 = vld [vmem:[#allocation5 + $0x38] sm:$0xff]
    %v187 = vunpack.c.l.b16 %v155
    %v188 = vunpack.c.h.b16 %v155
    %v189 = vunpack.c.l.b16 %v156
    %v190 = vunpack.c.h.b16 %v156
    %v191 = vunpack.c.l.b16 %v157
    %v192 = vunpack.c.h.b16 %v157
    %v193 = vunpack.c.l.b16 %v158
    %v194 = vunpack.c.h.b16 %v158
    %v195 = vunpack.c.l.b16 %v159
    %v196 = vunpack.c.h.b16 %v159
    %v197 = vunpack.c.l.b16 %v160
    %v198 = vunpack.c.h.b16 %v160
    %v199 = vunpack.c.l.b16 %v161
    %v200 = vunpack.c.h.b16 %v161
    %v201 = vunpack.c.l.b16 %v162
    %v202 = vunpack.c.h.b16 %v162
    %v203 = vpack.c.b16 %v189, %v187
    %v204 = vpack.c.b16 %v190, %v188
    %v205 = vpack.c.b16 %v193, %v191
    %v206 = vpack.c.b16 %v194, %v192
    %v207 = vpack.c.b16 %v197, %v195
    %v208 = vpack.c.b16 %v198, %v196
    %v209 = vpack.c.b16 %v201, %v199
    %v210 = vpack.c.b16 %v202, %v200
    %vm219 = vcmask 523264
    %v221 = vsel %vm219, 0, 0
    %223 = vmatprep.subr.bf16.mxu0 0
    %224 = vmatpush1.bf16.msra.mxu0 0
    %225 = vmatprep.subr.bf16.mxu0 0
    %226 = vmatpush1.bf16.msra.mxu0 0
    %227 = vmatprep.subr.bf16.mxu0 0
    %228 = vmatpush1.bf16.msra.mxu0 0
    %229 = vmatprep.subr.bf16.mxu0 0
    %230 = vmatpush1.bf16.msra.mxu0 0
    %231 = vmatprep.subr.bf16.mxu0 %v210
    %232 = vmatpush1.bf16.msra.mxu0 %v209
    %233 = vmatprep.subr.bf16.mxu0 %v208
    %234 = vmatpush1.bf16.msra.mxu0 %v207
    %235 = vmatprep.subr.bf16.mxu0 %v206
    %236 = vmatpush1.bf16.msra.mxu0 %v205
    %237 = vmatprep.subr.bf16.mxu0 %v204
    %238 = vmatpush1.bf16.msra.mxu0 %v203
    %239 = vmatprep.subr.bf16.mxu0 0
    %240 = vmatpush2.bf16.msra.mxu0 0
    %241 = vmatprep.subr.bf16.mxu0 0
    %242 = vmatpush2.bf16.msra.mxu0 0
    %243 = vmatprep.subr.bf16.mxu0 0
    %244 = vmatpush2.bf16.msra.mxu0 0
    %245 = vmatprep.subr.bf16.mxu0 0
    %246 = vmatpush2.bf16.msra.mxu0 0
    %247 = vmatprep.subr.bf16.mxu0 0
    %248 = vmatpush2.bf16.msra.mxu0 0
    %249 = vmatprep.subr.bf16.mxu0 0
    %250 = vmatpush2.bf16.msra.mxu0 0
    %251 = vmatprep.subr.bf16.mxu0 0
    %252 = vmatpush2.bf16.msra.mxu0 0
    %253 = vmatprep.subr.bf16.mxu0 0
    %254 = vmatpush2.bf16.msra.mxu0 0
    %255 = vmatprep.mubr.bf16.mxu0 0
    %256 = vmatmul.mubr.bf16.gmra.mxu0 %v221
    %v257 = vpop.f32.mrf.mxu0
    %v258 = vadd.f32 0.0, %v257
    %v259 = vpop.f32.mrf.mxu0
    %v260 = vadd.f32 0.0, %v259
    %v261 = vpop.f32.mrf.mxu0
    %v262 = vpop.f32.mrf.mxu0
    %263 = vdwg.mxu0
    %v264 = vadd.f32 %v147, %v258
    %v265 = vadd.f32 %v149, %v260
    %v266 = vxor.u32 %v264, 2147483648
    %v267 = vxor.u32 %v265, 2147483648
    %v268 = vmul.f32 %v266, 1.442695
    %v269 = vpow.pop %v268
    %v270 = vmul.f32 %v267, 1.442695
    %v271 = vpow.pop %v270
    %v272 = vadd.f32 %v269, 1.0
    %v273 = vadd.f32 %v271, 1.0
    %v274 = vrcp.pop %v272
    %v275 = vmul.f32 1.0, %v274
    %v276 = vrcp.pop %v273
    %v277 = vmul.f32 1.0, %v276
    %v278 = vtanh.pop %v265
    %v279 = vmul.f32 %v275, 0.0
    %v280 = vmul.f32 %v275, %v278
    %282 = vrot.lane.b32.xlu0 %v280, 64
    %v283 = vpop.permute.xlu0 %282
    %v285 = vadd.f32 %v279, %v283
    %v286 = vtanh.pop %v285
    %v287 = vmul.f32 %v277, %v286
    %v288 = vpack.c.bf16 %v287, %v287
    %290 = vrot.lane.b32.xlu0 %v288, 64
    %v291 = vpop.permute.xlu0 %290
    %v293 = vsel %vm219, %v291, 0
    %295 = vmatprep.subr.bf16.mxu0 0
    %296 = vmatpush1.bf16.msra.mxu0 0
    %297 = vmatprep.subr.bf16.mxu0 0
    %298 = vmatpush1.bf16.msra.mxu0 0
    %299 = vmatprep.subr.bf16.mxu0 0
    %300 = vmatpush1.bf16.msra.mxu0 0
    %301 = vmatprep.subr.bf16.mxu0 0
    %302 = vmatpush1.bf16.msra.mxu0 0
    %303 = vmatprep.subr.bf16.mxu0 %v210
    %304 = vmatpush1.bf16.msra.mxu0 %v209
    %305 = vmatprep.subr.bf16.mxu0 %v208
    %306 = vmatpush1.bf16.msra.mxu0 %v207
    %307 = vmatprep.subr.bf16.mxu0 %v206
    %308 = vmatpush1.bf16.msra.mxu0 %v205
    %309 = vmatprep.subr.bf16.mxu0 %v204
    %310 = vmatpush1.bf16.msra.mxu0 %v203
    %311 = vmatprep.subr.bf16.mxu0 0
    %312 = vmatpush2.bf16.msra.mxu0 0
    %313 = vmatprep.subr.bf16.mxu0 0
    %314 = vmatpush2.bf16.msra.mxu0 0
    %315 = vmatprep.subr.bf16.mxu0 0
    %316 = vmatpush2.bf16.msra.mxu0 0
    %317 = vmatprep.subr.bf16.mxu0 0
    %318 = vmatpush2.bf16.msra.mxu0 0
    %319 = vmatprep.subr.bf16.mxu0 0
    %320 = vmatpush2.bf16.msra.mxu0 0
    %321 = vmatprep.subr.bf16.mxu0 0
    %322 = vmatpush2.bf16.msra.mxu0 0
    %323 = vmatprep.subr.bf16.mxu0 0
    %324 = vmatpush2.bf16.msra.mxu0 0
    %325 = vmatprep.subr.bf16.mxu0 0
    %326 = vmatpush2.bf16.msra.mxu0 0
    %327 = vmatprep.mubr.bf16.mxu0 0
    %328 = vmatmul.mubr.bf16.gmra.mxu0 %v293
    %v329 = vpop.f32.mrf.mxu0
    %v330 = vadd.f32 0.0, %v329
    %v331 = vpop.f32.mrf.mxu0
    %v332 = vadd.f32 0.0, %v331
    %v333 = vpop.f32.mrf.mxu0
    %v334 = vpop.f32.mrf.mxu0
    %335 = vdwg.mxu0
    %v338 = vrot.slane %v330, 6
    %v339 = vrot.slane %v332, 6
    %v342 = vadd.f32 %v147, %v338
    %v343 = vadd.f32 %v149, %v339
    %v344 = vxor.u32 %v342, 2147483648
    %v345 = vxor.u32 %v343, 2147483648
    %v346 = vmul.f32 %v344, 1.442695
    %v347 = vpow.pop %v346
    %v348 = vmul.f32 %v345, 1.442695
    %v349 = vpow.pop %v348
    %v350 = vadd.f32 %v347, 1.0
    %v351 = vadd.f32 %v349, 1.0
    %v352 = vrcp.pop %v350
    %v353 = vmul.f32 1.0, %v352
    %v354 = vrcp.pop %v351
    %v355 = vmul.f32 1.0, %v354
    %v356 = vtanh.pop %v343
    %v358 = vrot.slane %v285, 6
    %v360 = vmul.f32 %v353, %v358
    %v361 = vmul.f32 %v353, %v356
    %363 = vrot.lane.b32.xlu0 %v361, 64
    %v364 = vpop.permute.xlu0 %363
    %v366 = vadd.f32 %v360, %v364
    %v367 = vtanh.pop %v366
    %v368 = vmul.f32 %v355, %v367
    %v369 = vpack.c.bf16 %v368, %v368
    %v371 = vrot.slane %v369, 1
    %372 = vrot.lane.b32.xlu0 %v371, 64
    %v373 = vpop.permute.xlu0 %372
    %v375 = vsel %vm219, %v373, 0
    %377 = vmatprep.subr.bf16.mxu0 0
    %378 = vmatpush1.bf16.msra.mxu0 0
    %379 = vmatprep.subr.bf16.mxu0 0
    %380 = vmatpush1.bf16.msra.mxu0 0
    %381 = vmatprep.subr.bf16.mxu0 0
    %382 = vmatpush1.bf16.msra.mxu0 0
    %383 = vmatprep.subr.bf16.mxu0 0
    %384 = vmatpush1.bf16.msra.mxu0 0
    %385 = vmatprep.subr.bf16.mxu0 %v210
    %386 = vmatpush1.bf16.msra.mxu0 %v209
    %387 = vmatprep.subr.bf16.mxu0 %v208
    %388 = vmatpush1.bf16.msra.mxu0 %v207
    %389 = vmatprep.subr.bf16.mxu0 %v206
    %390 = vmatpush1.bf16.msra.mxu0 %v205
    %391 = vmatprep.subr.bf16.mxu0 %v204
    %392 = vmatpush1.bf16.msra.mxu0 %v203
    %393 = vmatprep.subr.bf16.mxu0 0
    %394 = vmatpush2.bf16.msra.mxu0 0
    %395 = vmatprep.subr.bf16.mxu0 0
    %396 = vmatpush2.bf16.msra.mxu0 0
    %397 = vmatprep.subr.bf16.mxu0 0
    %398 = vmatpush2.bf16.msra.mxu0 0
    %399 = vmatprep.subr.bf16.mxu0 0
    %400 = vmatpush2.bf16.msra.mxu0 0
    %401 = vmatprep.subr.bf16.mxu0 0
    %402 = vmatpush2.bf16.msra.mxu0 0
    %403 = vmatprep.subr.bf16.mxu0 0
    %404 = vmatpush2.bf16.msra.mxu0 0
    %405 = vmatprep.subr.bf16.mxu0 0
    %406 = vmatpush2.bf16.msra.mxu0 0
    %407 = vmatprep.subr.bf16.mxu0 0
    %408 = vmatpush2.bf16.msra.mxu0 0
    %409 = vmatprep.mubr.bf16.mxu0 0
    %410 = vmatmul.mubr.bf16.gmra.mxu0 %v375
    %v411 = vpop.f32.mrf.mxu0
    %v412 = vadd.f32 0.0, %v411
    %v413 = vpop.f32.mrf.mxu0
    %v414 = vadd.f32 0.0, %v413
    %v415 = vpop.f32.mrf.mxu0
    %v416 = vpop.f32.mrf.mxu0
    %417 = vdwg.mxu0
    %v420 = vrot.slane %v412, 4
    %v421 = vrot.slane %v414, 4
    %v424 = vadd.f32 %v147, %v420
    %v425 = vadd.f32 %v149, %v421
    %v426 = vxor.u32 %v424, 2147483648
    %v427 = vxor.u32 %v425, 2147483648
    %v428 = vmul.f32 %v426, 1.442695
    %v429 = vpow.pop %v428
    %v430 = vmul.f32 %v427, 1.442695
    %v431 = vpow.pop %v430
    %v432 = vadd.f32 %v429, 1.0
    %v433 = vadd.f32 %v431, 1.0
    %v434 = vrcp.pop %v432
    %v435 = vmul.f32 1.0, %v434
    %v436 = vrcp.pop %v433
    %v437 = vmul.f32 1.0, %v436
    %v438 = vtanh.pop %v425
    %v440 = vrot.slane %v366, 6
    %v442 = vmul.f32 %v435, %v440
    %v443 = vmul.f32 %v435, %v438
    %445 = vrot.lane.b32.xlu0 %v443, 64
    %v446 = vpop.permute.xlu0 %445
    %v448 = vadd.f32 %v442, %v446
    %v449 = vtanh.pop %v448
    %v450 = vmul.f32 %v437, %v449
    %v451 = vpack.c.bf16 %v450, %v450
    %v453 = vrot.slane %v451, 2
    %454 = vrot.lane.b32.xlu0 %v453, 64
    %v455 = vpop.permute.xlu0 %454
    %v457 = vsel %vm219, %v455, 0
    %459 = vmatprep.subr.bf16.mxu0 0
    %460 = vmatpush1.bf16.msra.mxu0 0
    %461 = vmatprep.subr.bf16.mxu0 0
    %462 = vmatpush1.bf16.msra.mxu0 0
    %463 = vmatprep.subr.bf16.mxu0 0
    %464 = vmatpush1.bf16.msra.mxu0 0
    %465 = vmatprep.subr.bf16.mxu0 0
    %466 = vmatpush1.bf16.msra.mxu0 0
    %467 = vmatprep.subr.bf16.mxu0 %v210
    %468 = vmatpush1.bf16.msra.mxu0 %v209
    %469 = vmatprep.subr.bf16.mxu0 %v208
    %470 = vmatpush1.bf16.msra.mxu0 %v207
    %471 = vmatprep.subr.bf16.mxu0 %v206
    %472 = vmatpush1.bf16.msra.mxu0 %v205
    %473 = vmatprep.subr.bf16.mxu0 %v204
    %474 = vmatpush1.bf16.msra.mxu0 %v203
    %475 = vmatprep.subr.bf16.mxu0 0
    %476 = vmatpush2.bf16.msra.mxu0 0
    %477 = vmatprep.subr.bf16.mxu0 0
    %478 = vmatpush2.bf16.msra.mxu0 0
    %479 = vmatprep.subr.bf16.mxu0 0
    %480 = vmatpush2.bf16.msra.mxu0 0
    %481 = vmatprep.subr.bf16.mxu0 0
    %482 = vmatpush2.bf16.msra.mxu0 0
    %483 = vmatprep.subr.bf16.mxu0 0
    %484 = vmatpush2.bf16.msra.mxu0 0
    %485 = vmatprep.subr.bf16.mxu0 0
    %486 = vmatpush2.bf16.msra.mxu0 0
    %487 = vmatprep.subr.bf16.mxu0 0
    %488 = vmatpush2.bf16.msra.mxu0 0
    %489 = vmatprep.subr.bf16.mxu0 0
    %490 = vmatpush2.bf16.msra.mxu0 0
    %491 = vmatprep.mubr.bf16.mxu0 0
    %492 = vmatmul.mubr.bf16.gmra.mxu0 %v457
    %v493 = vpop.f32.mrf.mxu0
    %v494 = vadd.f32 0.0, %v493
    %v495 = vpop.f32.mrf.mxu0
    %v496 = vadd.f32 0.0, %v495
    %v497 = vpop.f32.mrf.mxu0
    %v498 = vpop.f32.mrf.mxu0
    %499 = vdwg.mxu0
    %v502 = vrot.slane %v494, 2
    %v503 = vrot.slane %v496, 2
    %v506 = vadd.f32 %v147, %v502
    %v507 = vadd.f32 %v149, %v503
    %v508 = vxor.u32 %v506, 2147483648
    %v509 = vxor.u32 %v507, 2147483648
    %v510 = vmul.f32 %v508, 1.442695
    %v511 = vpow.pop %v510
    %v512 = vmul.f32 %v509, 1.442695
    %v513 = vpow.pop %v512
    %v514 = vadd.f32 %v511, 1.0
    %v515 = vadd.f32 %v513, 1.0
    %v516 = vrcp.pop %v514
    %v517 = vmul.f32 1.0, %v516
    %v518 = vrcp.pop %v515
    %v519 = vmul.f32 1.0, %v518
    %v520 = vtanh.pop %v507
    %v522 = vrot.slane %v448, 6
    %v524 = vmul.f32 %v517, %v522
    %v525 = vmul.f32 %v517, %v520
    %527 = vrot.lane.b32.xlu0 %v525, 64
    %v528 = vpop.permute.xlu0 %527
    %v530 = vadd.f32 %v524, %v528
    %v531 = vtanh.pop %v530
    %v532 = vmul.f32 %v519, %v531
    %v533 = vpack.c.bf16 %v532, %v532
    %v535 = vrot.slane %v533, 3
    %536 = vrot.lane.b32.xlu0 %v535, 64
    %v537 = vpop.permute.xlu0 %536
    %v539 = vsel %vm219, %v537, 0
    %541 = vmatprep.subr.bf16.mxu0 0
    %542 = vmatpush1.bf16.msra.mxu0 0
    %543 = vmatprep.subr.bf16.mxu0 0
    %544 = vmatpush1.bf16.msra.mxu0 0
    %545 = vmatprep.subr.bf16.mxu0 0
    %546 = vmatpush1.bf16.msra.mxu0 0
    %547 = vmatprep.subr.bf16.mxu0 0
    %548 = vmatpush1.bf16.msra.mxu0 0
    %549 = vmatprep.subr.bf16.mxu0 %v210
    %550 = vmatpush1.bf16.msra.mxu0 %v209
    %551 = vmatprep.subr.bf16.mxu0 %v208
    %552 = vmatpush1.bf16.msra.mxu0 %v207
    %553 = vmatprep.subr.bf16.mxu0 %v206
    %554 = vmatpush1.bf16.msra.mxu0 %v205
    %555 = vmatprep.subr.bf16.mxu0 %v204
    %556 = vmatpush1.bf16.msra.mxu0 %v203
    %557 = vmatprep.subr.bf16.mxu0 0
    %558 = vmatpush2.bf16.msra.mxu0 0
    %559 = vmatprep.subr.bf16.mxu0 0
    %560 = vmatpush2.bf16.msra.mxu0 0
    %561 = vmatprep.subr.bf16.mxu0 0
    %562 = vmatpush2.bf16.msra.mxu0 0
    %563 = vmatprep.subr.bf16.mxu0 0
    %564 = vmatpush2.bf16.msra.mxu0 0
    %565 = vmatprep.subr.bf16.mxu0 0
    %566 = vmatpush2.bf16.msra.mxu0 0
    %567 = vmatprep.subr.bf16.mxu0 0
    %568 = vmatpush2.bf16.msra.mxu0 0
    %569 = vmatprep.subr.bf16.mxu0 0
    %570 = vmatpush2.bf16.msra.mxu0 0
    %571 = vmatprep.subr.bf16.mxu0 0
    %572 = vmatpush2.bf16.msra.mxu0 0
    %573 = vmatprep.mubr.bf16.mxu0 0
    %574 = vmatmul.mubr.bf16.gmra.mxu0 %v539
    %v575 = vpop.f32.mrf.mxu0
    %v576 = vadd.f32 0.0, %v575
    %v577 = vpop.f32.mrf.mxu0
    %v578 = vadd.f32 0.0, %v577
    %v579 = vpop.f32.mrf.mxu0
    %v580 = vpop.f32.mrf.mxu0
    %581 = vdwg.mxu0
    %v582 = vadd.f32 %v151, %v576
    %v583 = vadd.f32 %v153, %v578
    %v584 = vxor.u32 %v582, 2147483648
    %v585 = vxor.u32 %v583, 2147483648
    %v586 = vmul.f32 %v584, 1.442695
    %v587 = vpow.pop %v586
    %v588 = vmul.f32 %v585, 1.442695
    %v589 = vpow.pop %v588
    %v590 = vadd.f32 %v587, 1.0
    %v591 = vadd.f32 %v589, 1.0
    %v592 = vrcp.pop %v590
    %v593 = vmul.f32 1.0, %v592
    %v594 = vrcp.pop %v591
    %v595 = vmul.f32 1.0, %v594
    %v596 = vtanh.pop %v583
    %v598 = vrot.slane %v530, 6
    %v600 = vmul.f32 %v593, %v598
    %v601 = vmul.f32 %v593, %v596
    %603 = vrot.lane.b32.xlu0 %v601, 64
    %v604 = vpop.permute.xlu0 %603
    %v606 = vadd.f32 %v600, %v604
    %v607 = vtanh.pop %v606
    %v608 = vmul.f32 %v595, %v607
    %v609 = vpack.c.bf16 %v608, %v608
    %611 = vrot.lane.b32.xlu0 %v609, 64
    %v612 = vpop.permute.xlu0 %611
    %v621 = vunpack.c.l.b16 %v163
    %v622 = vunpack.c.h.b16 %v163
    %v623 = vunpack.c.l.b16 %v164
    %v624 = vunpack.c.h.b16 %v164
    %v625 = vunpack.c.l.b16 %v165
    %v626 = vunpack.c.h.b16 %v165
    %v627 = vunpack.c.l.b16 %v166
    %v628 = vunpack.c.h.b16 %v166
    %v629 = vunpack.c.l.b16 %v167
    %v630 = vunpack.c.h.b16 %v167
    %v631 = vunpack.c.l.b16 %v168
    %v632 = vunpack.c.h.b16 %v168
    %v633 = vunpack.c.l.b16 %v169
    %v634 = vunpack.c.h.b16 %v169
    %v635 = vunpack.c.l.b16 %v170
    %v636 = vunpack.c.h.b16 %v170
    %v637 = vpack.c.b16 %v623, %v621
    %v638 = vpack.c.b16 %v624, %v622
    %v639 = vpack.c.b16 %v627, %v625
    %v640 = vpack.c.b16 %v628, %v626
    %v641 = vpack.c.b16 %v631, %v629
    %v642 = vpack.c.b16 %v632, %v630
    %v643 = vpack.c.b16 %v635, %v633
    %v644 = vpack.c.b16 %v636, %v634
    %v654 = vsel %vm219, %v612, 0
    %656 = vmatprep.subr.bf16.mxu0 0
    %657 = vmatpush1.bf16.msra.mxu0 0
    %658 = vmatprep.subr.bf16.mxu0 0
    %659 = vmatpush1.bf16.msra.mxu0 0
    %660 = vmatprep.subr.bf16.mxu0 0
    %661 = vmatpush1.bf16.msra.mxu0 0
    %662 = vmatprep.subr.bf16.mxu0 0
    %663 = vmatpush1.bf16.msra.mxu0 0
    %664 = vmatprep.subr.bf16.mxu0 %v644
    %665 = vmatpush1.bf16.msra.mxu0 %v643
    %666 = vmatprep.subr.bf16.mxu0 %v642
    %667 = vmatpush1.bf16.msra.mxu0 %v641
    %668 = vmatprep.subr.bf16.mxu0 %v640
    %669 = vmatpush1.bf16.msra.mxu0 %v639
    %670 = vmatprep.subr.bf16.mxu0 %v638
    %671 = vmatpush1.bf16.msra.mxu0 %v637
    %672 = vmatprep.subr.bf16.mxu0 0
    %673 = vmatpush2.bf16.msra.mxu0 0
    %674 = vmatprep.subr.bf16.mxu0 0
    %675 = vmatpush2.bf16.msra.mxu0 0
    %676 = vmatprep.subr.bf16.mxu0 0
    %677 = vmatpush2.bf16.msra.mxu0 0
    %678 = vmatprep.subr.bf16.mxu0 0
    %679 = vmatpush2.bf16.msra.mxu0 0
    %680 = vmatprep.subr.bf16.mxu0 0
    %681 = vmatpush2.bf16.msra.mxu0 0
    %682 = vmatprep.subr.bf16.mxu0 0
    %683 = vmatpush2.bf16.msra.mxu0 0
    %684 = vmatprep.subr.bf16.mxu0 0
    %685 = vmatpush2.bf16.msra.mxu0 0
    %686 = vmatprep.subr.bf16.mxu0 0
    %687 = vmatpush2.bf16.msra.mxu0 0
    %688 = vmatprep.mubr.bf16.mxu0 0
    %689 = vmatmul.mubr.bf16.gmra.mxu0 %v654
    %v690 = vpop.f32.mrf.mxu0
    %v691 = vadd.f32 0.0, %v690
    %v692 = vpop.f32.mrf.mxu0
    %v693 = vadd.f32 0.0, %v692
    %v694 = vpop.f32.mrf.mxu0
    %v695 = vpop.f32.mrf.mxu0
    %696 = vdwg.mxu0
    %v705 = vunpack.c.l.b16 %v171
    %v706 = vunpack.c.h.b16 %v171
    %v707 = vunpack.c.l.b16 %v172
    %v708 = vunpack.c.h.b16 %v172
    %v709 = vunpack.c.l.b16 %v173
    %v710 = vunpack.c.h.b16 %v173
    %v711 = vunpack.c.l.b16 %v174
    %v712 = vunpack.c.h.b16 %v174
    %v713 = vunpack.c.l.b16 %v175
    %v714 = vunpack.c.h.b16 %v175
    %v715 = vunpack.c.l.b16 %v176
    %v716 = vunpack.c.h.b16 %v176
    %v717 = vunpack.c.l.b16 %v177
    %v718 = vunpack.c.h.b16 %v177
    %v719 = vunpack.c.l.b16 %v178
    %v720 = vunpack.c.h.b16 %v178
    %v721 = vpack.c.b16 %v707, %v705
    %v722 = vpack.c.b16 %v708, %v706
    %v723 = vpack.c.b16 %v711, %v709
    %v724 = vpack.c.b16 %v712, %v710
    %v725 = vpack.c.b16 %v715, %v713
    %v726 = vpack.c.b16 %v716, %v714
    %v727 = vpack.c.b16 %v719, %v717
    %v728 = vpack.c.b16 %v720, %v718
    %737 = vmatprep.subr.bf16.mxu0 0
    %738 = vmatpush1.bf16.msra.mxu0 0
    %739 = vmatprep.subr.bf16.mxu0 0
    %740 = vmatpush1.bf16.msra.mxu0 0
    %741 = vmatprep.subr.bf16.mxu0 0
    %742 = vmatpush1.bf16.msra.mxu0 0
    %743 = vmatprep.subr.bf16.mxu0 0
    %744 = vmatpush1.bf16.msra.mxu0 0
    %745 = vmatprep.subr.bf16.mxu0 %v728
    %746 = vmatpush1.bf16.msra.mxu0 %v727
    %747 = vmatprep.subr.bf16.mxu0 %v726
    %748 = vmatpush1.bf16.msra.mxu0 %v725
    %749 = vmatprep.subr.bf16.mxu0 %v724
    %750 = vmatpush1.bf16.msra.mxu0 %v723
    %751 = vmatprep.subr.bf16.mxu0 %v722
    %752 = vmatpush1.bf16.msra.mxu0 %v721
    %753 = vmatprep.subr.bf16.mxu0 0
    %754 = vmatpush2.bf16.msra.mxu0 0
    %755 = vmatprep.subr.bf16.mxu0 0
    %756 = vmatpush2.bf16.msra.mxu0 0
    %757 = vmatprep.subr.bf16.mxu0 0
    %758 = vmatpush2.bf16.msra.mxu0 0
    %759 = vmatprep.subr.bf16.mxu0 0
    %760 = vmatpush2.bf16.msra.mxu0 0
    %761 = vmatprep.subr.bf16.mxu0 0
    %762 = vmatpush2.bf16.msra.mxu0 0
    %763 = vmatprep.subr.bf16.mxu0 0
    %764 = vmatpush2.bf16.msra.mxu0 0
    %765 = vmatprep.subr.bf16.mxu0 0
    %766 = vmatpush2.bf16.msra.mxu0 0
    %767 = vmatprep.subr.bf16.mxu0 0
    %768 = vmatpush2.bf16.msra.mxu0 0
    %769 = vmatprep.mubr.bf16.mxu0 0
    %770 = vmatmul.mubr.bf16.gmra.mxu0 %v654
    %v771 = vpop.f32.mrf.mxu0
    %v772 = vadd.f32 0.0, %v771
    %v773 = vpop.f32.mrf.mxu0
    %v774 = vadd.f32 0.0, %v773
    %v775 = vpop.f32.mrf.mxu0
    %v776 = vpop.f32.mrf.mxu0
    %777 = vdwg.mxu0
    %778 = vmatprep.subr.bf16.mxu0 0
    %779 = vmatpush1.bf16.msra.mxu0 0
    %780 = vmatprep.subr.bf16.mxu0 0
    %781 = vmatpush1.bf16.msra.mxu0 0
    %782 = vmatprep.subr.bf16.mxu0 0
    %783 = vmatpush1.bf16.msra.mxu0 0
    %784 = vmatprep.subr.bf16.mxu0 0
    %785 = vmatpush1.bf16.msra.mxu0 0
    %786 = vmatprep.subr.bf16.mxu0 %v728
    %787 = vmatpush1.bf16.msra.mxu0 %v727
    %788 = vmatprep.subr.bf16.mxu0 %v726
    %789 = vmatpush1.bf16.msra.mxu0 %v725
    %790 = vmatprep.subr.bf16.mxu0 %v724
    %791 = vmatpush1.bf16.msra.mxu0 %v723
    %792 = vmatprep.subr.bf16.mxu0 %v722
    %793 = vmatpush1.bf16.msra.mxu0 %v721
    %794 = vmatprep.subr.bf16.mxu0 0
    %795 = vmatpush2.bf16.msra.mxu0 0
    %796 = vmatprep.subr.bf16.mxu0 0
    %797 = vmatpush2.bf16.msra.mxu0 0
    %798 = vmatprep.subr.bf16.mxu0 0
    %799 = vmatpush2.bf16.msra.mxu0 0
    %800 = vmatprep.subr.bf16.mxu0 0
    %801 = vmatpush2.bf16.msra.mxu0 0
    %802 = vmatprep.subr.bf16.mxu0 0
    %803 = vmatpush2.bf16.msra.mxu0 0
    %804 = vmatprep.subr.bf16.mxu0 0
    %805 = vmatpush2.bf16.msra.mxu0 0
    %806 = vmatprep.subr.bf16.mxu0 0
    %807 = vmatpush2.bf16.msra.mxu0 0
    %808 = vmatprep.subr.bf16.mxu0 0
    %809 = vmatpush2.bf16.msra.mxu0 0
    %810 = vmatprep.mubr.bf16.mxu0 0
    %811 = vmatmul.mubr.bf16.gmra.mxu0 %v539
    %v812 = vpop.f32.mrf.mxu0
    %v813 = vadd.f32 %v691, %v812
    %v814 = vpop.f32.mrf.mxu0
    %v815 = vadd.f32 %v693, %v814
    %v816 = vpop.f32.mrf.mxu0
    %v817 = vpop.f32.mrf.mxu0
    %818 = vdwg.mxu0
    %819 = vmatprep.subr.bf16.mxu0 0
    %820 = vmatpush1.bf16.msra.mxu0 0
    %821 = vmatprep.subr.bf16.mxu0 0
    %822 = vmatpush1.bf16.msra.mxu0 0
    %823 = vmatprep.subr.bf16.mxu0 0
    %824 = vmatpush1.bf16.msra.mxu0 0
    %825 = vmatprep.subr.bf16.mxu0 0
    %826 = vmatpush1.bf16.msra.mxu0 0
    %827 = vmatprep.subr.bf16.mxu0 %v644
    %828 = vmatpush1.bf16.msra.mxu0 %v643
    %829 = vmatprep.subr.bf16.mxu0 %v642
    %830 = vmatpush1.bf16.msra.mxu0 %v641
    %831 = vmatprep.subr.bf16.mxu0 %v640
    %832 = vmatpush1.bf16.msra.mxu0 %v639
    %833 = vmatprep.subr.bf16.mxu0 %v638
    %834 = vmatpush1.bf16.msra.mxu0 %v637
    %835 = vmatprep.subr.bf16.mxu0 0
    %836 = vmatpush2.bf16.msra.mxu0 0
    %837 = vmatprep.subr.bf16.mxu0 0
    %838 = vmatpush2.bf16.msra.mxu0 0
    %839 = vmatprep.subr.bf16.mxu0 0
    %840 = vmatpush2.bf16.msra.mxu0 0
    %841 = vmatprep.subr.bf16.mxu0 0
    %842 = vmatpush2.bf16.msra.mxu0 0
    %843 = vmatprep.subr.bf16.mxu0 0
    %844 = vmatpush2.bf16.msra.mxu0 0
    %845 = vmatprep.subr.bf16.mxu0 0
    %846 = vmatpush2.bf16.msra.mxu0 0
    %847 = vmatprep.subr.bf16.mxu0 0
    %848 = vmatpush2.bf16.msra.mxu0 0
    %849 = vmatprep.subr.bf16.mxu0 0
    %850 = vmatpush2.bf16.msra.mxu0 0
    %851 = vmatprep.mubr.bf16.mxu0 0
    %852 = vmatmul.mubr.bf16.gmra.mxu0 %v539
    %v853 = vpop.f32.mrf.mxu0
    %v854 = vadd.f32 %v772, %v853
    %v855 = vpop.f32.mrf.mxu0
    %v856 = vadd.f32 %v774, %v855
    %v857 = vpop.f32.mrf.mxu0
    %v858 = vpop.f32.mrf.mxu0
    %859 = vdwg.mxu0
    %860 = vmatprep.subr.bf16.mxu0 0
    %861 = vmatpush1.bf16.msra.mxu0 0
    %862 = vmatprep.subr.bf16.mxu0 0
    %863 = vmatpush1.bf16.msra.mxu0 0
    %864 = vmatprep.subr.bf16.mxu0 0
    %865 = vmatpush1.bf16.msra.mxu0 0
    %866 = vmatprep.subr.bf16.mxu0 0
    %867 = vmatpush1.bf16.msra.mxu0 0
    %868 = vmatprep.subr.bf16.mxu0 %v210
    %869 = vmatpush1.bf16.msra.mxu0 %v209
    %870 = vmatprep.subr.bf16.mxu0 %v208
    %871 = vmatpush1.bf16.msra.mxu0 %v207
    %872 = vmatprep.subr.bf16.mxu0 %v206
    %873 = vmatpush1.bf16.msra.mxu0 %v205
    %874 = vmatprep.subr.bf16.mxu0 %v204
    %875 = vmatpush1.bf16.msra.mxu0 %v203
    %876 = vmatprep.subr.bf16.mxu0 0
    %877 = vmatpush2.bf16.msra.mxu0 0
    %878 = vmatprep.subr.bf16.mxu0 0
    %879 = vmatpush2.bf16.msra.mxu0 0
    %880 = vmatprep.subr.bf16.mxu0 0
    %881 = vmatpush2.bf16.msra.mxu0 0
    %882 = vmatprep.subr.bf16.mxu0 0
    %883 = vmatpush2.bf16.msra.mxu0 0
    %884 = vmatprep.subr.bf16.mxu0 0
    %885 = vmatpush2.bf16.msra.mxu0 0
    %886 = vmatprep.subr.bf16.mxu0 0
    %887 = vmatpush2.bf16.msra.mxu0 0
    %888 = vmatprep.subr.bf16.mxu0 0
    %889 = vmatpush2.bf16.msra.mxu0 0
    %890 = vmatprep.subr.bf16.mxu0 0
    %891 = vmatpush2.bf16.msra.mxu0 0
    %892 = vmatprep.mubr.bf16.mxu0 0
    %893 = vmatmul.mubr.bf16.gmra.mxu0 %v654
    %v894 = vpop.f32.mrf.mxu0
    %v895 = vadd.f32 0.0, %v894
    %v896 = vpop.f32.mrf.mxu0
    %v897 = vadd.f32 0.0, %v896
    %v898 = vpop.f32.mrf.mxu0
    %v899 = vpop.f32.mrf.mxu0
    %900 = vdwg.mxu0
    %v903 = vrot.slane %v895, 6
    %v904 = vrot.slane %v897, 6
    %v907 = vadd.f32 %v151, %v903
    %v908 = vadd.f32 %v153, %v904
    %v909 = vxor.u32 %v907, 2147483648
    %v910 = vxor.u32 %v908, 2147483648
    %v911 = vmul.f32 %v909, 1.442695
    %v912 = vpow.pop %v911
    %v913 = vmul.f32 %v910, 1.442695
    %v914 = vpow.pop %v913
    %v915 = vadd.f32 %v912, 1.0
    %v916 = vadd.f32 %v914, 1.0
    %v917 = vrcp.pop %v915
    %v918 = vmul.f32 1.0, %v917
    %v919 = vrcp.pop %v916
    %v920 = vmul.f32 1.0, %v919
    %v921 = vtanh.pop %v908
    %v923 = vrot.slane %v606, 6
    %v925 = vmul.f32 %v918, %v923
    %v926 = vmul.f32 %v918, %v921
    %928 = vrot.lane.b32.xlu0 %v926, 64
    %v929 = vpop.permute.xlu0 %928
    %v931 = vadd.f32 %v925, %v929
    %v932 = vtanh.pop %v931
    %v933 = vmul.f32 %v920, %v932
    %v934 = vpack.c.bf16 %v933, %v933
    %v936 = vrot.slane %v934, 1
    %937 = vrot.lane.b32.xlu0 %v936, 64
    %v938 = vpop.permute.xlu0 %937
    %v940 = vsel %vm219, %v938, 0
    %942 = vmatprep.subr.bf16.mxu0 0
    %943 = vmatpush1.bf16.msra.mxu0 0
    %944 = vmatprep.subr.bf16.mxu0 0
    %945 = vmatpush1.bf16.msra.mxu0 0
    %946 = vmatprep.subr.bf16.mxu0 0
    %947 = vmatpush1.bf16.msra.mxu0 0
    %948 = vmatprep.subr.bf16.mxu0 0
    %949 = vmatpush1.bf16.msra.mxu0 0
    %950 = vmatprep.subr.bf16.mxu0 %v644
    %951 = vmatpush1.bf16.msra.mxu0 %v643
    %952 = vmatprep.subr.bf16.mxu0 %v642
    %953 = vmatpush1.bf16.msra.mxu0 %v641
    %954 = vmatprep.subr.bf16.mxu0 %v640
    %955 = vmatpush1.bf16.msra.mxu0 %v639
    %956 = vmatprep.subr.bf16.mxu0 %v638
    %957 = vmatpush1.bf16.msra.mxu0 %v637
    %958 = vmatprep.subr.bf16.mxu0 0
    %959 = vmatpush2.bf16.msra.mxu0 0
    %960 = vmatprep.subr.bf16.mxu0 0
    %961 = vmatpush2.bf16.msra.mxu0 0
    %962 = vmatprep.subr.bf16.mxu0 0
    %963 = vmatpush2.bf16.msra.mxu0 0
    %964 = vmatprep.subr.bf16.mxu0 0
    %965 = vmatpush2.bf16.msra.mxu0 0
    %966 = vmatprep.subr.bf16.mxu0 0
    %967 = vmatpush2.bf16.msra.mxu0 0
    %968 = vmatprep.subr.bf16.mxu0 0
    %969 = vmatpush2.bf16.msra.mxu0 0
    %970 = vmatprep.subr.bf16.mxu0 0
    %971 = vmatpush2.bf16.msra.mxu0 0
    %972 = vmatprep.subr.bf16.mxu0 0
    %973 = vmatpush2.bf16.msra.mxu0 0
    %974 = vmatprep.mubr.bf16.mxu0 0
    %975 = vmatmul.mubr.bf16.gmra.mxu0 %v940
    %v976 = vpop.f32.mrf.mxu0
    %v977 = vadd.f32 0.0, %v976
    %v978 = vpop.f32.mrf.mxu0
    %v979 = vadd.f32 0.0, %v978
    %v980 = vpop.f32.mrf.mxu0
    %v981 = vpop.f32.mrf.mxu0
    %982 = vdwg.mxu0
    %983 = vmatprep.subr.bf16.mxu0 0
    %984 = vmatpush1.bf16.msra.mxu0 0
    %985 = vmatprep.subr.bf16.mxu0 0
    %986 = vmatpush1.bf16.msra.mxu0 0
    %987 = vmatprep.subr.bf16.mxu0 0
    %988 = vmatpush1.bf16.msra.mxu0 0
    %989 = vmatprep.subr.bf16.mxu0 0
    %990 = vmatpush1.bf16.msra.mxu0 0
    %991 = vmatprep.subr.bf16.mxu0 %v728
    %992 = vmatpush1.bf16.msra.mxu0 %v727
    %993 = vmatprep.subr.bf16.mxu0 %v726
    %994 = vmatpush1.bf16.msra.mxu0 %v725
    %995 = vmatprep.subr.bf16.mxu0 %v724
    %996 = vmatpush1.bf16.msra.mxu0 %v723
    %997 = vmatprep.subr.bf16.mxu0 %v722
    %998 = vmatpush1.bf16.msra.mxu0 %v721
    %999 = vmatprep.subr.bf16.mxu0 0
    %1000 = vmatpush2.bf16.msra.mxu0 0
    %1001 = vmatprep.subr.bf16.mxu0 0
    %1002 = vmatpush2.bf16.msra.mxu0 0
    %1003 = vmatprep.subr.bf16.mxu0 0
    %1004 = vmatpush2.bf16.msra.mxu0 0
    %1005 = vmatprep.subr.bf16.mxu0 0
    %1006 = vmatpush2.bf16.msra.mxu0 0
    %1007 = vmatprep.subr.bf16.mxu0 0
    %1008 = vmatpush2.bf16.msra.mxu0 0
    %1009 = vmatprep.subr.bf16.mxu0 0
    %1010 = vmatpush2.bf16.msra.mxu0 0
    %1011 = vmatprep.subr.bf16.mxu0 0
    %1012 = vmatpush2.bf16.msra.mxu0 0
    %1013 = vmatprep.subr.bf16.mxu0 0
    %1014 = vmatpush2.bf16.msra.mxu0 0
    %1015 = vmatprep.mubr.bf16.mxu0 0
    %1016 = vmatmul.mubr.bf16.gmra.mxu0 %v940
    %v1017 = vpop.f32.mrf.mxu0
    %v1018 = vadd.f32 0.0, %v1017
    %v1019 = vpop.f32.mrf.mxu0
    %v1020 = vadd.f32 0.0, %v1019
    %v1021 = vpop.f32.mrf.mxu0
    %v1022 = vpop.f32.mrf.mxu0
    %1023 = vdwg.mxu0
    %1024 = vmatprep.subr.bf16.mxu0 0
    %1025 = vmatpush1.bf16.msra.mxu0 0
    %1026 = vmatprep.subr.bf16.mxu0 0
    %1027 = vmatpush1.bf16.msra.mxu0 0
    %1028 = vmatprep.subr.bf16.mxu0 0
    %1029 = vmatpush1.bf16.msra.mxu0 0
    %1030 = vmatprep.subr.bf16.mxu0 0
    %1031 = vmatpush1.bf16.msra.mxu0 0
    %1032 = vmatprep.subr.bf16.mxu0 %v728
    %1033 = vmatpush1.bf16.msra.mxu0 %v727
    %1034 = vmatprep.subr.bf16.mxu0 %v726
    %1035 = vmatpush1.bf16.msra.mxu0 %v725
    %1036 = vmatprep.subr.bf16.mxu0 %v724
    %1037 = vmatpush1.bf16.msra.mxu0 %v723
    %1038 = vmatprep.subr.bf16.mxu0 %v722
    %1039 = vmatpush1.bf16.msra.mxu0 %v721
    %1040 = vmatprep.subr.bf16.mxu0 0
    %1041 = vmatpush2.bf16.msra.mxu0 0
    %1042 = vmatprep.subr.bf16.mxu0 0
    %1043 = vmatpush2.bf16.msra.mxu0 0
    %1044 = vmatprep.subr.bf16.mxu0 0
    %1045 = vmatpush2.bf16.msra.mxu0 0
    %1046 = vmatprep.subr.bf16.mxu0 0
    %1047 = vmatpush2.bf16.msra.mxu0 0
    %1048 = vmatprep.subr.bf16.mxu0 0
    %1049 = vmatpush2.bf16.msra.mxu0 0
    %1050 = vmatprep.subr.bf16.mxu0 0
    %1051 = vmatpush2.bf16.msra.mxu0 0
    %1052 = vmatprep.subr.bf16.mxu0 0
    %1053 = vmatpush2.bf16.msra.mxu0 0
    %1054 = vmatprep.subr.bf16.mxu0 0
    %1055 = vmatpush2.bf16.msra.mxu0 0
    %1056 = vmatprep.mubr.bf16.mxu0 0
    %1057 = vmatmul.mubr.bf16.gmra.mxu0 %v457
    %v1058 = vpop.f32.mrf.mxu0
    %v1059 = vadd.f32 %v977, %v1058
    %v1060 = vpop.f32.mrf.mxu0
    %v1061 = vadd.f32 %v979, %v1060
    %v1062 = vpop.f32.mrf.mxu0
    %v1063 = vpop.f32.mrf.mxu0
    %1064 = vdwg.mxu0
    %1065 = vmatprep.subr.bf16.mxu0 0
    %1066 = vmatpush1.bf16.msra.mxu0 0
    %1067 = vmatprep.subr.bf16.mxu0 0
    %1068 = vmatpush1.bf16.msra.mxu0 0
    %1069 = vmatprep.subr.bf16.mxu0 0
    %1070 = vmatpush1.bf16.msra.mxu0 0
    %1071 = vmatprep.subr.bf16.mxu0 0
    %1072 = vmatpush1.bf16.msra.mxu0 0
    %1073 = vmatprep.subr.bf16.mxu0 %v644
    %1074 = vmatpush1.bf16.msra.mxu0 %v643
    %1075 = vmatprep.subr.bf16.mxu0 %v642
    %1076 = vmatpush1.bf16.msra.mxu0 %v641
    %1077 = vmatprep.subr.bf16.mxu0 %v640
    %1078 = vmatpush1.bf16.msra.mxu0 %v639
    %1079 = vmatprep.subr.bf16.mxu0 %v638
    %1080 = vmatpush1.bf16.msra.mxu0 %v637
    %1081 = vmatprep.subr.bf16.mxu0 0
    %1082 = vmatpush2.bf16.msra.mxu0 0
    %1083 = vmatprep.subr.bf16.mxu0 0
    %1084 = vmatpush2.bf16.msra.mxu0 0
    %1085 = vmatprep.subr.bf16.mxu0 0
    %1086 = vmatpush2.bf16.msra.mxu0 0
    %1087 = vmatprep.subr.bf16.mxu0 0
    %1088 = vmatpush2.bf16.msra.mxu0 0
    %1089 = vmatprep.subr.bf16.mxu0 0
    %1090 = vmatpush2.bf16.msra.mxu0 0
    %1091 = vmatprep.subr.bf16.mxu0 0
    %1092 = vmatpush2.bf16.msra.mxu0 0
    %1093 = vmatprep.subr.bf16.mxu0 0
    %1094 = vmatpush2.bf16.msra.mxu0 0
    %1095 = vmatprep.subr.bf16.mxu0 0
    %1096 = vmatpush2.bf16.msra.mxu0 0
    %1097 = vmatprep.mubr.bf16.mxu0 0
    %1098 = vmatmul.mubr.bf16.gmra.mxu0 %v457
    %v1099 = vpop.f32.mrf.mxu0
    %v1100 = vadd.f32 %v1018, %v1099
    %v1101 = vpop.f32.mrf.mxu0
    %v1102 = vadd.f32 %v1020, %v1101
    %v1103 = vpop.f32.mrf.mxu0
    %v1104 = vpop.f32.mrf.mxu0
    %1105 = vdwg.mxu0
    %1106 = vmatprep.subr.bf16.mxu0 0
    %1107 = vmatpush1.bf16.msra.mxu0 0
    %1108 = vmatprep.subr.bf16.mxu0 0
    %1109 = vmatpush1.bf16.msra.mxu0 0
    %1110 = vmatprep.subr.bf16.mxu0 0
    %1111 = vmatpush1.bf16.msra.mxu0 0
    %1112 = vmatprep.subr.bf16.mxu0 0
    %1113 = vmatpush1.bf16.msra.mxu0 0
    %1114 = vmatprep.subr.bf16.mxu0 %v210
    %1115 = vmatpush1.bf16.msra.mxu0 %v209
    %1116 = vmatprep.subr.bf16.mxu0 %v208
    %1117 = vmatpush1.bf16.msra.mxu0 %v207
    %1118 = vmatprep.subr.bf16.mxu0 %v206
    %1119 = vmatpush1.bf16.msra.mxu0 %v205
    %1120 = vmatprep.subr.bf16.mxu0 %v204
    %1121 = vmatpush1.bf16.msra.mxu0 %v203
    %1122 = vmatprep.subr.bf16.mxu0 0
    %1123 = vmatpush2.bf16.msra.mxu0 0
    %1124 = vmatprep.subr.bf16.mxu0 0
    %1125 = vmatpush2.bf16.msra.mxu0 0
    %1126 = vmatprep.subr.bf16.mxu0 0
    %1127 = vmatpush2.bf16.msra.mxu0 0
    %1128 = vmatprep.subr.bf16.mxu0 0
    %1129 = vmatpush2.bf16.msra.mxu0 0
    %1130 = vmatprep.subr.bf16.mxu0 0
    %1131 = vmatpush2.bf16.msra.mxu0 0
    %1132 = vmatprep.subr.bf16.mxu0 0
    %1133 = vmatpush2.bf16.msra.mxu0 0
    %1134 = vmatprep.subr.bf16.mxu0 0
    %1135 = vmatpush2.bf16.msra.mxu0 0
    %1136 = vmatprep.subr.bf16.mxu0 0
    %1137 = vmatpush2.bf16.msra.mxu0 0
    %1138 = vmatprep.mubr.bf16.mxu0 0
    %1139 = vmatmul.mubr.bf16.gmra.mxu0 %v940
    %v1140 = vpop.f32.mrf.mxu0
    %v1141 = vadd.f32 0.0, %v1140
    %v1142 = vpop.f32.mrf.mxu0
    %v1143 = vadd.f32 0.0, %v1142
    %v1144 = vpop.f32.mrf.mxu0
    %v1145 = vpop.f32.mrf.mxu0
    %1146 = vdwg.mxu0
    %v1149 = vrot.slane %v1141, 4
    %v1150 = vrot.slane %v1143, 4
    %v1153 = vadd.f32 %v151, %v1149
    %v1154 = vadd.f32 %v153, %v1150
    %v1155 = vxor.u32 %v1153, 2147483648
    %v1156 = vxor.u32 %v1154, 2147483648
    %v1157 = vmul.f32 %v1155, 1.442695
    %v1158 = vpow.pop %v1157
    %v1159 = vmul.f32 %v1156, 1.442695
    %v1160 = vpow.pop %v1159
    %v1161 = vadd.f32 %v1158, 1.0
    %v1162 = vadd.f32 %v1160, 1.0
    %v1163 = vrcp.pop %v1161
    %v1164 = vmul.f32 1.0, %v1163
    %v1165 = vrcp.pop %v1162
    %v1166 = vmul.f32 1.0, %v1165
    %v1167 = vtanh.pop %v1154
    %v1169 = vrot.slane %v931, 6
    %v1171 = vmul.f32 %v1164, %v1169
    %v1172 = vmul.f32 %v1164, %v1167
    %1174 = vrot.lane.b32.xlu0 %v1172, 64
    %v1175 = vpop.permute.xlu0 %1174
    %v1177 = vadd.f32 %v1171, %v1175
    %v1178 = vtanh.pop %v1177
    %v1179 = vmul.f32 %v1166, %v1178
    %v1180 = vpack.c.bf16 %v1179, %v1179
    %v1182 = vrot.slane %v1180, 2
    %1183 = vrot.lane.b32.xlu0 %v1182, 64
    %v1184 = vpop.permute.xlu0 %1183
    %v1186 = vsel %vm219, %v1184, 0
    %1188 = vmatprep.subr.bf16.mxu0 0
    %1189 = vmatpush1.bf16.msra.mxu0 0
    %1190 = vmatprep.subr.bf16.mxu0 0
    %1191 = vmatpush1.bf16.msra.mxu0 0
    %1192 = vmatprep.subr.bf16.mxu0 0
    %1193 = vmatpush1.bf16.msra.mxu0 0
    %1194 = vmatprep.subr.bf16.mxu0 0
    %1195 = vmatpush1.bf16.msra.mxu0 0
    %1196 = vmatprep.subr.bf16.mxu0 %v644
    %1197 = vmatpush1.bf16.msra.mxu0 %v643
    %1198 = vmatprep.subr.bf16.mxu0 %v642
    %1199 = vmatpush1.bf16.msra.mxu0 %v641
    %1200 = vmatprep.subr.bf16.mxu0 %v640
    %1201 = vmatpush1.bf16.msra.mxu0 %v639
    %1202 = vmatprep.subr.bf16.mxu0 %v638
    %1203 = vmatpush1.bf16.msra.mxu0 %v637
    %1204 = vmatprep.subr.bf16.mxu0 0
    %1205 = vmatpush2.bf16.msra.mxu0 0
    %1206 = vmatprep.subr.bf16.mxu0 0
    %1207 = vmatpush2.bf16.msra.mxu0 0
    %1208 = vmatprep.subr.bf16.mxu0 0
    %1209 = vmatpush2.bf16.msra.mxu0 0
    %1210 = vmatprep.subr.bf16.mxu0 0
    %1211 = vmatpush2.bf16.msra.mxu0 0
    %1212 = vmatprep.subr.bf16.mxu0 0
    %1213 = vmatpush2.bf16.msra.mxu0 0
    %1214 = vmatprep.subr.bf16.mxu0 0
    %1215 = vmatpush2.bf16.msra.mxu0 0
    %1216 = vmatprep.subr.bf16.mxu0 0
    %1217 = vmatpush2.bf16.msra.mxu0 0
    %1218 = vmatprep.subr.bf16.mxu0 0
    %1219 = vmatpush2.bf16.msra.mxu0 0
    %1220 = vmatprep.mubr.bf16.mxu0 0
    %1221 = vmatmul.mubr.bf16.gmra.mxu0 %v1186
    %v1222 = vpop.f32.mrf.mxu0
    %v1223 = vadd.f32 0.0, %v1222
    %v1224 = vpop.f32.mrf.mxu0
    %v1225 = vadd.f32 0.0, %v1224
    %v1226 = vpop.f32.mrf.mxu0
    %v1227 = vpop.f32.mrf.mxu0
    %1228 = vdwg.mxu0
    %1229 = vmatprep.subr.bf16.mxu0 0
    %1230 = vmatpush1.bf16.msra.mxu0 0
    %1231 = vmatprep.subr.bf16.mxu0 0
    %1232 = vmatpush1.bf16.msra.mxu0 0
    %1233 = vmatprep.subr.bf16.mxu0 0
    %1234 = vmatpush1.bf16.msra.mxu0 0
    %1235 = vmatprep.subr.bf16.mxu0 0
    %1236 = vmatpush1.bf16.msra.mxu0 0
    %1237 = vmatprep.subr.bf16.mxu0 %v728
    %1238 = vmatpush1.bf16.msra.mxu0 %v727
    %1239 = vmatprep.subr.bf16.mxu0 %v726
    %1240 = vmatpush1.bf16.msra.mxu0 %v725
    %1241 = vmatprep.subr.bf16.mxu0 %v724
    %1242 = vmatpush1.bf16.msra.mxu0 %v723
    %1243 = vmatprep.subr.bf16.mxu0 %v722
    %1244 = vmatpush1.bf16.msra.mxu0 %v721
    %1245 = vmatprep.subr.bf16.mxu0 0
    %1246 = vmatpush2.bf16.msra.mxu0 0
    %1247 = vmatprep.subr.bf16.mxu0 0
    %1248 = vmatpush2.bf16.msra.mxu0 0
    %1249 = vmatprep.subr.bf16.mxu0 0
    %1250 = vmatpush2.bf16.msra.mxu0 0
    %1251 = vmatprep.subr.bf16.mxu0 0
    %1252 = vmatpush2.bf16.msra.mxu0 0
    %1253 = vmatprep.subr.bf16.mxu0 0
    %1254 = vmatpush2.bf16.msra.mxu0 0
    %1255 = vmatprep.subr.bf16.mxu0 0
    %1256 = vmatpush2.bf16.msra.mxu0 0
    %1257 = vmatprep.subr.bf16.mxu0 0
    %1258 = vmatpush2.bf16.msra.mxu0 0
    %1259 = vmatprep.subr.bf16.mxu0 0
    %1260 = vmatpush2.bf16.msra.mxu0 0
    %1261 = vmatprep.mubr.bf16.mxu0 0
    %1262 = vmatmul.mubr.bf16.gmra.mxu0 %v1186
    %v1263 = vpop.f32.mrf.mxu0
    %v1264 = vadd.f32 0.0, %v1263
    %v1265 = vpop.f32.mrf.mxu0
    %v1266 = vadd.f32 0.0, %v1265
    %v1267 = vpop.f32.mrf.mxu0
    %v1268 = vpop.f32.mrf.mxu0
    %1269 = vdwg.mxu0
    %1270 = vmatprep.subr.bf16.mxu0 0
    %1271 = vmatpush1.bf16.msra.mxu0 0
    %1272 = vmatprep.subr.bf16.mxu0 0
    %1273 = vmatpush1.bf16.msra.mxu0 0
    %1274 = vmatprep.subr.bf16.mxu0 0
    %1275 = vmatpush1.bf16.msra.mxu0 0
    %1276 = vmatprep.subr.bf16.mxu0 0
    %1277 = vmatpush1.bf16.msra.mxu0 0
    %1278 = vmatprep.subr.bf16.mxu0 %v728
    %1279 = vmatpush1.bf16.msra.mxu0 %v727
    %1280 = vmatprep.subr.bf16.mxu0 %v726
    %1281 = vmatpush1.bf16.msra.mxu0 %v725
    %1282 = vmatprep.subr.bf16.mxu0 %v724
    %1283 = vmatpush1.bf16.msra.mxu0 %v723
    %1284 = vmatprep.subr.bf16.mxu0 %v722
    %1285 = vmatpush1.bf16.msra.mxu0 %v721
    %1286 = vmatprep.subr.bf16.mxu0 0
    %1287 = vmatpush2.bf16.msra.mxu0 0
    %1288 = vmatprep.subr.bf16.mxu0 0
    %1289 = vmatpush2.bf16.msra.mxu0 0
    %1290 = vmatprep.subr.bf16.mxu0 0
    %1291 = vmatpush2.bf16.msra.mxu0 0
    %1292 = vmatprep.subr.bf16.mxu0 0
    %1293 = vmatpush2.bf16.msra.mxu0 0
    %1294 = vmatprep.subr.bf16.mxu0 0
    %1295 = vmatpush2.bf16.msra.mxu0 0
    %1296 = vmatprep.subr.bf16.mxu0 0
    %1297 = vmatpush2.bf16.msra.mxu0 0
    %1298 = vmatprep.subr.bf16.mxu0 0
    %1299 = vmatpush2.bf16.msra.mxu0 0
    %1300 = vmatprep.subr.bf16.mxu0 0
    %1301 = vmatpush2.bf16.msra.mxu0 0
    %1302 = vmatprep.mubr.bf16.mxu0 0
    %1303 = vmatmul.mubr.bf16.gmra.mxu0 %v375
    %v1304 = vpop.f32.mrf.mxu0
    %v1305 = vadd.f32 %v1223, %v1304
    %v1306 = vpop.f32.mrf.mxu0
    %v1307 = vadd.f32 %v1225, %v1306
    %v1308 = vpop.f32.mrf.mxu0
    %v1309 = vpop.f32.mrf.mxu0
    %1310 = vdwg.mxu0
    %1311 = vmatprep.subr.bf16.mxu0 0
    %1312 = vmatpush1.bf16.msra.mxu0 0
    %1313 = vmatprep.subr.bf16.mxu0 0
    %1314 = vmatpush1.bf16.msra.mxu0 0
    %1315 = vmatprep.subr.bf16.mxu0 0
    %1316 = vmatpush1.bf16.msra.mxu0 0
    %1317 = vmatprep.subr.bf16.mxu0 0
    %1318 = vmatpush1.bf16.msra.mxu0 0
    %1319 = vmatprep.subr.bf16.mxu0 %v644
    %1320 = vmatpush1.bf16.msra.mxu0 %v643
    %1321 = vmatprep.subr.bf16.mxu0 %v642
    %1322 = vmatpush1.bf16.msra.mxu0 %v641
    %1323 = vmatprep.subr.bf16.mxu0 %v640
    %1324 = vmatpush1.bf16.msra.mxu0 %v639
    %1325 = vmatprep.subr.bf16.mxu0 %v638
    %1326 = vmatpush1.bf16.msra.mxu0 %v637
    %1327 = vmatprep.subr.bf16.mxu0 0
    %1328 = vmatpush2.bf16.msra.mxu0 0
    %1329 = vmatprep.subr.bf16.mxu0 0
    %1330 = vmatpush2.bf16.msra.mxu0 0
    %1331 = vmatprep.subr.bf16.mxu0 0
    %1332 = vmatpush2.bf16.msra.mxu0 0
    %1333 = vmatprep.subr.bf16.mxu0 0
    %1334 = vmatpush2.bf16.msra.mxu0 0
    %1335 = vmatprep.subr.bf16.mxu0 0
    %1336 = vmatpush2.bf16.msra.mxu0 0
    %1337 = vmatprep.subr.bf16.mxu0 0
    %1338 = vmatpush2.bf16.msra.mxu0 0
    %1339 = vmatprep.subr.bf16.mxu0 0
    %1340 = vmatpush2.bf16.msra.mxu0 0
    %1341 = vmatprep.subr.bf16.mxu0 0
    %1342 = vmatpush2.bf16.msra.mxu0 0
    %1343 = vmatprep.mubr.bf16.mxu0 0
    %1344 = vmatmul.mubr.bf16.gmra.mxu0 %v375
    %v1345 = vpop.f32.mrf.mxu0
    %v1346 = vadd.f32 %v1264, %v1345
    %v1347 = vpop.f32.mrf.mxu0
    %v1348 = vadd.f32 %v1266, %v1347
    %v1349 = vpop.f32.mrf.mxu0
    %v1350 = vpop.f32.mrf.mxu0
    %1351 = vdwg.mxu0
    %1352 = vmatprep.subr.bf16.mxu0 0
    %1353 = vmatpush1.bf16.msra.mxu0 0
    %1354 = vmatprep.subr.bf16.mxu0 0
    %1355 = vmatpush1.bf16.msra.mxu0 0
    %1356 = vmatprep.subr.bf16.mxu0 0
    %1357 = vmatpush1.bf16.msra.mxu0 0
    %1358 = vmatprep.subr.bf16.mxu0 0
    %1359 = vmatpush1.bf16.msra.mxu0 0
    %1360 = vmatprep.subr.bf16.mxu0 %v210
    %1361 = vmatpush1.bf16.msra.mxu0 %v209
    %1362 = vmatprep.subr.bf16.mxu0 %v208
    %1363 = vmatpush1.bf16.msra.mxu0 %v207
    %1364 = vmatprep.subr.bf16.mxu0 %v206
    %1365 = vmatpush1.bf16.msra.mxu0 %v205
    %1366 = vmatprep.subr.bf16.mxu0 %v204
    %1367 = vmatpush1.bf16.msra.mxu0 %v203
    %1368 = vmatprep.subr.bf16.mxu0 0
    %1369 = vmatpush2.bf16.msra.mxu0 0
    %1370 = vmatprep.subr.bf16.mxu0 0
    %1371 = vmatpush2.bf16.msra.mxu0 0
    %1372 = vmatprep.subr.bf16.mxu0 0
    %1373 = vmatpush2.bf16.msra.mxu0 0
    %1374 = vmatprep.subr.bf16.mxu0 0
    %1375 = vmatpush2.bf16.msra.mxu0 0
    %1376 = vmatprep.subr.bf16.mxu0 0
    %1377 = vmatpush2.bf16.msra.mxu0 0
    %1378 = vmatprep.subr.bf16.mxu0 0
    %1379 = vmatpush2.bf16.msra.mxu0 0
    %1380 = vmatprep.subr.bf16.mxu0 0
    %1381 = vmatpush2.bf16.msra.mxu0 0
    %1382 = vmatprep.subr.bf16.mxu0 0
    %1383 = vmatpush2.bf16.msra.mxu0 0
    %1384 = vmatprep.mubr.bf16.mxu0 0
    %1385 = vmatmul.mubr.bf16.gmra.mxu0 %v1186
    %v1386 = vpop.f32.mrf.mxu0
    %v1387 = vadd.f32 0.0, %v1386
    %v1388 = vpop.f32.mrf.mxu0
    %v1389 = vadd.f32 0.0, %v1388
    %v1390 = vpop.f32.mrf.mxu0
    %v1391 = vpop.f32.mrf.mxu0
    %1392 = vdwg.mxu0
    %v1395 = vrot.slane %v1387, 2
    %v1396 = vrot.slane %v1389, 2
    %v1399 = vadd.f32 %v151, %v1395
    %v1400 = vadd.f32 %v153, %v1396
    %v1401 = vxor.u32 %v1399, 2147483648
    %v1402 = vxor.u32 %v1400, 2147483648
    %v1403 = vmul.f32 %v1401, 1.442695
    %v1404 = vpow.pop %v1403
    %v1405 = vmul.f32 %v1402, 1.442695
    %v1406 = vpow.pop %v1405
    %v1407 = vadd.f32 %v1404, 1.0
    %v1408 = vadd.f32 %v1406, 1.0
    %v1409 = vrcp.pop %v1407
    %v1410 = vmul.f32 1.0, %v1409
    %v1411 = vrcp.pop %v1408
    %v1412 = vmul.f32 1.0, %v1411
    %v1413 = vtanh.pop %v1400
    %v1415 = vrot.slane %v1177, 6
    %v1417 = vmul.f32 %v1410, %v1415
    %v1418 = vmul.f32 %v1410, %v1413
    %1420 = vrot.lane.b32.xlu0 %v1418, 64
    %v1421 = vpop.permute.xlu0 %1420
    %v1423 = vadd.f32 %v1417, %v1421
    %v1424 = vtanh.pop %v1423
    %v1425 = vmul.f32 %v1412, %v1424
    %v1426 = vpack.c.bf16 %v1425, %v1425
    %v1428 = vrot.slane %v1426, 3
    %1429 = vrot.lane.b32.xlu0 %v1428, 64
    %v1430 = vpop.permute.xlu0 %1429
    %v1432 = vsel %vm219, %v1430, 0
    %1434 = vmatprep.subr.bf16.mxu0 0
    %1435 = vmatpush1.bf16.msra.mxu0 0
    %1436 = vmatprep.subr.bf16.mxu0 0
    %1437 = vmatpush1.bf16.msra.mxu0 0
    %1438 = vmatprep.subr.bf16.mxu0 0
    %1439 = vmatpush1.bf16.msra.mxu0 0
    %1440 = vmatprep.subr.bf16.mxu0 0
    %1441 = vmatpush1.bf16.msra.mxu0 0
    %1442 = vmatprep.subr.bf16.mxu0 %v644
    %1443 = vmatpush1.bf16.msra.mxu0 %v643
    %1444 = vmatprep.subr.bf16.mxu0 %v642
    %1445 = vmatpush1.bf16.msra.mxu0 %v641
    %1446 = vmatprep.subr.bf16.mxu0 %v640
    %1447 = vmatpush1.bf16.msra.mxu0 %v639
    %1448 = vmatprep.subr.bf16.mxu0 %v638
    %1449 = vmatpush1.bf16.msra.mxu0 %v637
    %1450 = vmatprep.subr.bf16.mxu0 0
    %1451 = vmatpush2.bf16.msra.mxu0 0
    %1452 = vmatprep.subr.bf16.mxu0 0
    %1453 = vmatpush2.bf16.msra.mxu0 0
    %1454 = vmatprep.subr.bf16.mxu0 0
    %1455 = vmatpush2.bf16.msra.mxu0 0
    %1456 = vmatprep.subr.bf16.mxu0 0
    %1457 = vmatpush2.bf16.msra.mxu0 0
    %1458 = vmatprep.subr.bf16.mxu0 0
    %1459 = vmatpush2.bf16.msra.mxu0 0
    %1460 = vmatprep.subr.bf16.mxu0 0
    %1461 = vmatpush2.bf16.msra.mxu0 0
    %1462 = vmatprep.subr.bf16.mxu0 0
    %1463 = vmatpush2.bf16.msra.mxu0 0
    %1464 = vmatprep.subr.bf16.mxu0 0
    %1465 = vmatpush2.bf16.msra.mxu0 0
    %1466 = vmatprep.mubr.bf16.mxu0 0
    %1467 = vmatmul.mubr.bf16.gmra.mxu0 %v1432
    %v1468 = vpop.f32.mrf.mxu0
    %v1469 = vadd.f32 0.0, %v1468
    %v1470 = vpop.f32.mrf.mxu0
    %v1471 = vadd.f32 0.0, %v1470
    %v1472 = vpop.f32.mrf.mxu0
    %v1473 = vpop.f32.mrf.mxu0
    %1474 = vdwg.mxu0
    %1475 = vmatprep.subr.bf16.mxu0 0
    %1476 = vmatpush1.bf16.msra.mxu0 0
    %1477 = vmatprep.subr.bf16.mxu0 0
    %1478 = vmatpush1.bf16.msra.mxu0 0
    %1479 = vmatprep.subr.bf16.mxu0 0
    %1480 = vmatpush1.bf16.msra.mxu0 0
    %1481 = vmatprep.subr.bf16.mxu0 0
    %1482 = vmatpush1.bf16.msra.mxu0 0
    %1483 = vmatprep.subr.bf16.mxu0 %v728
    %1484 = vmatpush1.bf16.msra.mxu0 %v727
    %1485 = vmatprep.subr.bf16.mxu0 %v726
    %1486 = vmatpush1.bf16.msra.mxu0 %v725
    %1487 = vmatprep.subr.bf16.mxu0 %v724
    %1488 = vmatpush1.bf16.msra.mxu0 %v723
    %1489 = vmatprep.subr.bf16.mxu0 %v722
    %1490 = vmatpush1.bf16.msra.mxu0 %v721
    %1491 = vmatprep.subr.bf16.mxu0 0
    %1492 = vmatpush2.bf16.msra.mxu0 0
    %1493 = vmatprep.subr.bf16.mxu0 0
    %1494 = vmatpush2.bf16.msra.mxu0 0
    %1495 = vmatprep.subr.bf16.mxu0 0
    %1496 = vmatpush2.bf16.msra.mxu0 0
    %1497 = vmatprep.subr.bf16.mxu0 0
    %1498 = vmatpush2.bf16.msra.mxu0 0
    %1499 = vmatprep.subr.bf16.mxu0 0
    %1500 = vmatpush2.bf16.msra.mxu0 0
    %1501 = vmatprep.subr.bf16.mxu0 0
    %1502 = vmatpush2.bf16.msra.mxu0 0
    %1503 = vmatprep.subr.bf16.mxu0 0
    %1504 = vmatpush2.bf16.msra.mxu0 0
    %1505 = vmatprep.subr.bf16.mxu0 0
    %1506 = vmatpush2.bf16.msra.mxu0 0
    %1507 = vmatprep.mubr.bf16.mxu0 0
    %1508 = vmatmul.mubr.bf16.gmra.mxu0 %v1432
    %v1509 = vpop.f32.mrf.mxu0
    %v1510 = vadd.f32 0.0, %v1509
    %v1511 = vpop.f32.mrf.mxu0
    %v1512 = vadd.f32 0.0, %v1511
    %v1513 = vpop.f32.mrf.mxu0
    %v1514 = vpop.f32.mrf.mxu0
    %1515 = vdwg.mxu0
    %1516 = vmatprep.subr.bf16.mxu0 0
    %1517 = vmatpush1.bf16.msra.mxu0 0
    %1518 = vmatprep.subr.bf16.mxu0 0
    %1519 = vmatpush1.bf16.msra.mxu0 0
    %1520 = vmatprep.subr.bf16.mxu0 0
    %1521 = vmatpush1.bf16.msra.mxu0 0
    %1522 = vmatprep.subr.bf16.mxu0 0
    %1523 = vmatpush1.bf16.msra.mxu0 0
    %1524 = vmatprep.subr.bf16.mxu0 %v728
    %1525 = vmatpush1.bf16.msra.mxu0 %v727
    %1526 = vmatprep.subr.bf16.mxu0 %v726
    %1527 = vmatpush1.bf16.msra.mxu0 %v725
    %1528 = vmatprep.subr.bf16.mxu0 %v724
    %1529 = vmatpush1.bf16.msra.mxu0 %v723
    %1530 = vmatprep.subr.bf16.mxu0 %v722
    %1531 = vmatpush1.bf16.msra.mxu0 %v721
    %1532 = vmatprep.subr.bf16.mxu0 0
    %1533 = vmatpush2.bf16.msra.mxu0 0
    %1534 = vmatprep.subr.bf16.mxu0 0
    %1535 = vmatpush2.bf16.msra.mxu0 0
    %1536 = vmatprep.subr.bf16.mxu0 0
    %1537 = vmatpush2.bf16.msra.mxu0 0
    %1538 = vmatprep.subr.bf16.mxu0 0
    %1539 = vmatpush2.bf16.msra.mxu0 0
    %1540 = vmatprep.subr.bf16.mxu0 0
    %1541 = vmatpush2.bf16.msra.mxu0 0
    %1542 = vmatprep.subr.bf16.mxu0 0
    %1543 = vmatpush2.bf16.msra.mxu0 0
    %1544 = vmatprep.subr.bf16.mxu0 0
    %1545 = vmatpush2.bf16.msra.mxu0 0
    %1546 = vmatprep.subr.bf16.mxu0 0
    %1547 = vmatpush2.bf16.msra.mxu0 0
    %1548 = vmatprep.mubr.bf16.mxu0 0
    %1549 = vmatmul.mubr.bf16.gmra.mxu0 %v293
    %v1550 = vpop.f32.mrf.mxu0
    %v1551 = vadd.f32 %v1469, %v1550
    %v1552 = vpop.f32.mrf.mxu0
    %v1553 = vadd.f32 %v1471, %v1552
    %v1554 = vpop.f32.mrf.mxu0
    %v1555 = vpop.f32.mrf.mxu0
    %1556 = vdwg.mxu0
    %1557 = vmatprep.subr.bf16.mxu0 0
    %1558 = vmatpush1.bf16.msra.mxu0 0
    %1559 = vmatprep.subr.bf16.mxu0 0
    %1560 = vmatpush1.bf16.msra.mxu0 0
    %1561 = vmatprep.subr.bf16.mxu0 0
    %1562 = vmatpush1.bf16.msra.mxu0 0
    %1563 = vmatprep.subr.bf16.mxu0 0
    %1564 = vmatpush1.bf16.msra.mxu0 0
    %1565 = vmatprep.subr.bf16.mxu0 %v644
    %1566 = vmatpush1.bf16.msra.mxu0 %v643
    %1567 = vmatprep.subr.bf16.mxu0 %v642
    %1568 = vmatpush1.bf16.msra.mxu0 %v641
    %1569 = vmatprep.subr.bf16.mxu0 %v640
    %1570 = vmatpush1.bf16.msra.mxu0 %v639
    %1571 = vmatprep.subr.bf16.mxu0 %v638
    %1572 = vmatpush1.bf16.msra.mxu0 %v637
    %1573 = vmatprep.subr.bf16.mxu0 0
    %1574 = vmatpush2.bf16.msra.mxu0 0
    %1575 = vmatprep.subr.bf16.mxu0 0
    %1576 = vmatpush2.bf16.msra.mxu0 0
    %1577 = vmatprep.subr.bf16.mxu0 0
    %1578 = vmatpush2.bf16.msra.mxu0 0
    %1579 = vmatprep.subr.bf16.mxu0 0
    %1580 = vmatpush2.bf16.msra.mxu0 0
    %1581 = vmatprep.subr.bf16.mxu0 0
    %1582 = vmatpush2.bf16.msra.mxu0 0
    %1583 = vmatprep.subr.bf16.mxu0 0
    %1584 = vmatpush2.bf16.msra.mxu0 0
    %1585 = vmatprep.subr.bf16.mxu0 0
    %1586 = vmatpush2.bf16.msra.mxu0 0
    %1587 = vmatprep.subr.bf16.mxu0 0
    %1588 = vmatpush2.bf16.msra.mxu0 0
    %1589 = vmatprep.mubr.bf16.mxu0 0
    %1590 = vmatmul.mubr.bf16.gmra.mxu0 %v293
    %v1591 = vpop.f32.mrf.mxu0
    %v1592 = vadd.f32 %v1510, %v1591
    %v1593 = vpop.f32.mrf.mxu0
    %v1594 = vadd.f32 %v1512, %v1593
    %v1595 = vpop.f32.mrf.mxu0
    %v1596 = vpop.f32.mrf.mxu0
    %1597 = vdwg.mxu0
    %v1598 = vld [vmem:[%s5] sm:$0x3]
    %v1600 = vlaneseq
    %v1601 = vshrl.u32 %v1600, 7
    %v1602 = vsub.s32 0, %v1601
    %v1603 = vrot.slane %v1598, %v1602
    %v1604 = vlaneseq
    %v1605 = vshrl.u32 %v1604, 7
    %v1606 = vsub.s32 1, %v1605
    %v1607 = vrot.slane %v1598, %v1606
    %v1610 = vadd.f32 %v1592, %v1603
    %v1611 = vadd.f32 %v1594, %v1607
    %v1612 = vadd.f32 %v1346, %v1603
    %v1613 = vadd.f32 %v1348, %v1607
    %v1614 = vadd.f32 %v1100, %v1603
    %v1615 = vadd.f32 %v1102, %v1607
    %v1616 = vadd.f32 %v854, %v1603
    %v1617 = vadd.f32 %v856, %v1607
    %v1618 = vadd.f32 %v813, %v1603
    %v1619 = vadd.f32 %v815, %v1607
    %v1620 = vadd.f32 %v1059, %v1603
    %v1621 = vadd.f32 %v1061, %v1607
    %v1622 = vadd.f32 %v1305, %v1603
    %v1623 = vadd.f32 %v1307, %v1607
    %v1624 = vadd.f32 %v1551, %v1603
    %v1625 = vadd.f32 %v1553, %v1607
    %v1626 = vld [vmem:[%s4] sm:$0xff]
    %v1627 = vld [vmem:[%s4 + $0x8] sm:$0xff]
    %v1628 = vld [vmem:[%s4 + $0x10] sm:$0xff]
    %v1629 = vld [vmem:[%s4 + $0x18] sm:$0xff]
    %v1630 = vld [vmem:[%s4 + $0x20] sm:$0xff]
    %v1631 = vld [vmem:[%s4 + $0x28] sm:$0xff]
    %v1632 = vld [vmem:[%s4 + $0x30] sm:$0xff]
    %v1633 = vld [vmem:[%s4 + $0x38] sm:$0xff]
    %v1642 = vunpack.c.l.b16 %v1626
    %v1643 = vunpack.c.h.b16 %v1626
    %v1644 = vunpack.c.l.b16 %v1627
    %v1645 = vunpack.c.h.b16 %v1627
    %v1646 = vunpack.c.l.b16 %v1628
    %v1647 = vunpack.c.h.b16 %v1628
    %v1648 = vunpack.c.l.b16 %v1629
    %v1649 = vunpack.c.h.b16 %v1629
    %v1650 = vunpack.c.l.b16 %v1630
    %v1651 = vunpack.c.h.b16 %v1630
    %v1652 = vunpack.c.l.b16 %v1631
    %v1653 = vunpack.c.h.b16 %v1631
    %v1654 = vunpack.c.l.b16 %v1632
    %v1655 = vunpack.c.h.b16 %v1632
    %v1656 = vunpack.c.l.b16 %v1633
    %v1657 = vunpack.c.h.b16 %v1633
    %v1658 = vpack.c.b16 %v1644, %v1642
    %v1659 = vpack.c.b16 %v1645, %v1643
    %v1660 = vpack.c.b16 %v1648, %v1646
    %v1661 = vpack.c.b16 %v1649, %v1647
    %v1662 = vpack.c.b16 %v1652, %v1650
    %v1663 = vpack.c.b16 %v1653, %v1651
    %v1664 = vpack.c.b16 %v1656, %v1654
    %v1665 = vpack.c.b16 %v1657, %v1655
    %1674 = vmatprep.subr.bf16.mxu0 0
    %1675 = vmatpush1.bf16.msra.mxu0 0
    %1676 = vmatprep.subr.bf16.mxu0 0
    %1677 = vmatpush1.bf16.msra.mxu0 0
    %1678 = vmatprep.subr.bf16.mxu0 0
    %1679 = vmatpush1.bf16.msra.mxu0 0
    %1680 = vmatprep.subr.bf16.mxu0 0
    %1681 = vmatpush1.bf16.msra.mxu0 0
    %1682 = vmatprep.subr.bf16.mxu0 %v1665
    %1683 = vmatpush1.bf16.msra.mxu0 %v1664
    %1684 = vmatprep.subr.bf16.mxu0 %v1663
    %1685 = vmatpush1.bf16.msra.mxu0 %v1662
    %1686 = vmatprep.subr.bf16.mxu0 %v1661
    %1687 = vmatpush1.bf16.msra.mxu0 %v1660
    %1688 = vmatprep.subr.bf16.mxu0 %v1659
    %1689 = vmatpush1.bf16.msra.mxu0 %v1658
    %1690 = vmatprep.subr.bf16.mxu0 0
    %1691 = vmatpush2.bf16.msra.mxu0 0
    %1692 = vmatprep.subr.bf16.mxu0 0
    %1693 = vmatpush2.bf16.msra.mxu0 0
    %1694 = vmatprep.subr.bf16.mxu0 0
    %1695 = vmatpush2.bf16.msra.mxu0 0
    %1696 = vmatprep.subr.bf16.mxu0 0
    %1697 = vmatpush2.bf16.msra.mxu0 0
    %1698 = vmatprep.subr.bf16.mxu0 0
    %1699 = vmatpush2.bf16.msra.mxu0 0
    %1700 = vmatprep.subr.bf16.mxu0 0
    %1701 = vmatpush2.bf16.msra.mxu0 0
    %1702 = vmatprep.subr.bf16.mxu0 0
    %1703 = vmatpush2.bf16.msra.mxu0 0
    %1704 = vmatprep.subr.bf16.mxu0 0
    %1705 = vmatpush2.bf16.msra.mxu0 0
    %1706 = vmatprep.mubr.bf16.mxu0 0
    %1707 = vmatmul.mubr.bf16.gmra.mxu0 %v221
    %v1708 = vpop.f32.mrf.mxu0
    %v1709 = vadd.f32 0.0, %v1708
    %v1710 = vpop.f32.mrf.mxu0
    %v1711 = vadd.f32 0.0, %v1710
    %v1712 = vpop.f32.mrf.mxu0
    %v1713 = vpop.f32.mrf.mxu0
    %1714 = vdwg.mxu0
    %v1715 = vadd.f32 %v1610, %v1709
    %v1716 = vadd.f32 %v1611, %v1711
    %v1717 = vxor.u32 %v1715, 2147483648
    %v1718 = vxor.u32 %v1716, 2147483648
    %v1719 = vmul.f32 %v1717, 1.442695
    %v1720 = vpow.pop %v1719
    %v1721 = vmul.f32 %v1718, 1.442695
    %v1722 = vpow.pop %v1721
    %v1723 = vadd.f32 %v1720, 1.0
    %v1724 = vadd.f32 %v1722, 1.0
    %v1725 = vrcp.pop %v1723
    %v1726 = vmul.f32 1.0, %v1725
    %v1727 = vrcp.pop %v1724
    %v1728 = vmul.f32 1.0, %v1727
    %v1729 = vtanh.pop %v1716
    %v1730 = vmul.f32 %v1726, 0.0
    %v1731 = vmul.f32 %v1726, %v1729
    %1733 = vrot.lane.b32.xlu0 %v1731, 64
    %v1734 = vpop.permute.xlu0 %1733
    %v1736 = vadd.f32 %v1730, %v1734
    %v1737 = vtanh.pop %v1736
    %v1738 = vmul.f32 %v1728, %v1737
    %v1739 = vpack.c.bf16 %v1738, %v1738
    %1741 = vrot.lane.b32.xlu0 %v1739, 64
    %v1742 = vpop.permute.xlu0 %1741
    %v1744 = vsel %vm219, %v1742, 0
    %1746 = vmatprep.subr.bf16.mxu0 0
    %1747 = vmatpush1.bf16.msra.mxu0 0
    %1748 = vmatprep.subr.bf16.mxu0 0
    %1749 = vmatpush1.bf16.msra.mxu0 0
    %1750 = vmatprep.subr.bf16.mxu0 0
    %1751 = vmatpush1.bf16.msra.mxu0 0
    %1752 = vmatprep.subr.bf16.mxu0 0
    %1753 = vmatpush1.bf16.msra.mxu0 0
    %1754 = vmatprep.subr.bf16.mxu0 %v1665
    %1755 = vmatpush1.bf16.msra.mxu0 %v1664
    %1756 = vmatprep.subr.bf16.mxu0 %v1663
    %1757 = vmatpush1.bf16.msra.mxu0 %v1662
    %1758 = vmatprep.subr.bf16.mxu0 %v1661
    %1759 = vmatpush1.bf16.msra.mxu0 %v1660
    %1760 = vmatprep.subr.bf16.mxu0 %v1659
    %1761 = vmatpush1.bf16.msra.mxu0 %v1658
    %1762 = vmatprep.subr.bf16.mxu0 0
    %1763 = vmatpush2.bf16.msra.mxu0 0
    %1764 = vmatprep.subr.bf16.mxu0 0
    %1765 = vmatpush2.bf16.msra.mxu0 0
    %1766 = vmatprep.subr.bf16.mxu0 0
    %1767 = vmatpush2.bf16.msra.mxu0 0
    %1768 = vmatprep.subr.bf16.mxu0 0
    %1769 = vmatpush2.bf16.msra.mxu0 0
    %1770 = vmatprep.subr.bf16.mxu0 0
    %1771 = vmatpush2.bf16.msra.mxu0 0
    %1772 = vmatprep.subr.bf16.mxu0 0
    %1773 = vmatpush2.bf16.msra.mxu0 0
    %1774 = vmatprep.subr.bf16.mxu0 0
    %1775 = vmatpush2.bf16.msra.mxu0 0
    %1776 = vmatprep.subr.bf16.mxu0 0
    %1777 = vmatpush2.bf16.msra.mxu0 0
    %1778 = vmatprep.mubr.bf16.mxu0 0
    %1779 = vmatmul.mubr.bf16.gmra.mxu0 %v1744
    %v1780 = vpop.f32.mrf.mxu0
    %v1781 = vadd.f32 0.0, %v1780
    %v1782 = vpop.f32.mrf.mxu0
    %v1783 = vadd.f32 0.0, %v1782
    %v1784 = vpop.f32.mrf.mxu0
    %v1785 = vpop.f32.mrf.mxu0
    %1786 = vdwg.mxu0
    %v1787 = vadd.f32 %v1612, %v1781
    %v1788 = vadd.f32 %v1613, %v1783
    %v1789 = vxor.u32 %v1787, 2147483648
    %v1790 = vxor.u32 %v1788, 2147483648
    %v1791 = vmul.f32 %v1789, 1.442695
    %v1792 = vpow.pop %v1791
    %v1793 = vmul.f32 %v1790, 1.442695
    %v1794 = vpow.pop %v1793
    %v1795 = vadd.f32 %v1792, 1.0
    %v1796 = vadd.f32 %v1794, 1.0
    %v1797 = vrcp.pop %v1795
    %v1798 = vmul.f32 1.0, %v1797
    %v1799 = vrcp.pop %v1796
    %v1800 = vmul.f32 1.0, %v1799
    %v1801 = vtanh.pop %v1788
    %v1802 = vmul.f32 %v1798, %v1736
    %v1803 = vmul.f32 %v1798, %v1801
    %1805 = vrot.lane.b32.xlu0 %v1803, 64
    %v1806 = vpop.permute.xlu0 %1805
    %v1808 = vadd.f32 %v1802, %v1806
    %v1809 = vtanh.pop %v1808
    %v1810 = vmul.f32 %v1800, %v1809
    %v1811 = vpack.c.bf16 %v1810, %v1810
    %1813 = vrot.lane.b32.xlu0 %v1811, 64
    %v1814 = vpop.permute.xlu0 %1813
    %v1816 = vsel %vm219, %v1814, 0
    %1818 = vmatprep.subr.bf16.mxu0 0
    %1819 = vmatpush1.bf16.msra.mxu0 0
    %1820 = vmatprep.subr.bf16.mxu0 0
    %1821 = vmatpush1.bf16.msra.mxu0 0
    %1822 = vmatprep.subr.bf16.mxu0 0
    %1823 = vmatpush1.bf16.msra.mxu0 0
    %1824 = vmatprep.subr.bf16.mxu0 0
    %1825 = vmatpush1.bf16.msra.mxu0 0
    %1826 = vmatprep.subr.bf16.mxu0 %v1665
    %1827 = vmatpush1.bf16.msra.mxu0 %v1664
    %1828 = vmatprep.subr.bf16.mxu0 %v1663
    %1829 = vmatpush1.bf16.msra.mxu0 %v1662
    %1830 = vmatprep.subr.bf16.mxu0 %v1661
    %1831 = vmatpush1.bf16.msra.mxu0 %v1660
    %1832 = vmatprep.subr.bf16.mxu0 %v1659
    %1833 = vmatpush1.bf16.msra.mxu0 %v1658
    %1834 = vmatprep.subr.bf16.mxu0 0
    %1835 = vmatpush2.bf16.msra.mxu0 0
    %1836 = vmatprep.subr.bf16.mxu0 0
    %1837 = vmatpush2.bf16.msra.mxu0 0
    %1838 = vmatprep.subr.bf16.mxu0 0
    %1839 = vmatpush2.bf16.msra.mxu0 0
    %1840 = vmatprep.subr.bf16.mxu0 0
    %1841 = vmatpush2.bf16.msra.mxu0 0
    %1842 = vmatprep.subr.bf16.mxu0 0
    %1843 = vmatpush2.bf16.msra.mxu0 0
    %1844 = vmatprep.subr.bf16.mxu0 0
    %1845 = vmatpush2.bf16.msra.mxu0 0
    %1846 = vmatprep.subr.bf16.mxu0 0
    %1847 = vmatpush2.bf16.msra.mxu0 0
    %1848 = vmatprep.subr.bf16.mxu0 0
    %1849 = vmatpush2.bf16.msra.mxu0 0
    %1850 = vmatprep.mubr.bf16.mxu0 0
    %1851 = vmatmul.mubr.bf16.gmra.mxu0 %v1816
    %v1852 = vpop.f32.mrf.mxu0
    %v1853 = vadd.f32 0.0, %v1852
    %v1854 = vpop.f32.mrf.mxu0
    %v1855 = vadd.f32 0.0, %v1854
    %v1856 = vpop.f32.mrf.mxu0
    %v1857 = vpop.f32.mrf.mxu0
    %1858 = vdwg.mxu0
    %v1859 = vadd.f32 %v1614, %v1853
    %v1860 = vadd.f32 %v1615, %v1855
    %v1861 = vxor.u32 %v1859, 2147483648
    %v1862 = vxor.u32 %v1860, 2147483648
    %v1863 = vmul.f32 %v1861, 1.442695
    %v1864 = vpow.pop %v1863
    %v1865 = vmul.f32 %v1862, 1.442695
    %v1866 = vpow.pop %v1865
    %v1867 = vadd.f32 %v1864, 1.0
    %v1868 = vadd.f32 %v1866, 1.0
    %v1869 = vrcp.pop %v1867
    %v1870 = vmul.f32 1.0, %v1869
    %v1871 = vrcp.pop %v1868
    %v1872 = vmul.f32 1.0, %v1871
    %v1873 = vtanh.pop %v1860
    %v1874 = vmul.f32 %v1870, %v1808
    %v1875 = vmul.f32 %v1870, %v1873
    %1877 = vrot.lane.b32.xlu0 %v1875, 64
    %v1878 = vpop.permute.xlu0 %1877
    %v1880 = vadd.f32 %v1874, %v1878
    %v1881 = vtanh.pop %v1880
    %v1882 = vmul.f32 %v1872, %v1881
    %v1883 = vpack.c.bf16 %v1882, %v1882
    %1885 = vrot.lane.b32.xlu0 %v1883, 64
    %v1886 = vpop.permute.xlu0 %1885
    %v1888 = vsel %vm219, %v1886, 0
    %1890 = vmatprep.subr.bf16.mxu0 0
    %1891 = vmatpush1.bf16.msra.mxu0 0
    %1892 = vmatprep.subr.bf16.mxu0 0
    %1893 = vmatpush1.bf16.msra.mxu0 0
    %1894 = vmatprep.subr.bf16.mxu0 0
    %1895 = vmatpush1.bf16.msra.mxu0 0
    %1896 = vmatprep.subr.bf16.mxu0 0
    %1897 = vmatpush1.bf16.msra.mxu0 0
    %1898 = vmatprep.subr.bf16.mxu0 %v1665
    %1899 = vmatpush1.bf16.msra.mxu0 %v1664
    %1900 = vmatprep.subr.bf16.mxu0 %v1663
    %1901 = vmatpush1.bf16.msra.mxu0 %v1662
    %1902 = vmatprep.subr.bf16.mxu0 %v1661
    %1903 = vmatpush1.bf16.msra.mxu0 %v1660
    %1904 = vmatprep.subr.bf16.mxu0 %v1659
    %1905 = vmatpush1.bf16.msra.mxu0 %v1658
    %1906 = vmatprep.subr.bf16.mxu0 0
    %1907 = vmatpush2.bf16.msra.mxu0 0
    %1908 = vmatprep.subr.bf16.mxu0 0
    %1909 = vmatpush2.bf16.msra.mxu0 0
    %1910 = vmatprep.subr.bf16.mxu0 0
    %1911 = vmatpush2.bf16.msra.mxu0 0
    %1912 = vmatprep.subr.bf16.mxu0 0
    %1913 = vmatpush2.bf16.msra.mxu0 0
    %1914 = vmatprep.subr.bf16.mxu0 0
    %1915 = vmatpush2.bf16.msra.mxu0 0
    %1916 = vmatprep.subr.bf16.mxu0 0
    %1917 = vmatpush2.bf16.msra.mxu0 0
    %1918 = vmatprep.subr.bf16.mxu0 0
    %1919 = vmatpush2.bf16.msra.mxu0 0
    %1920 = vmatprep.subr.bf16.mxu0 0
    %1921 = vmatpush2.bf16.msra.mxu0 0
    %1922 = vmatprep.mubr.bf16.mxu0 0
    %1923 = vmatmul.mubr.bf16.gmra.mxu0 %v1888
    %v1924 = vpop.f32.mrf.mxu0
    %v1925 = vadd.f32 0.0, %v1924
    %v1926 = vpop.f32.mrf.mxu0
    %v1927 = vadd.f32 0.0, %v1926
    %v1928 = vpop.f32.mrf.mxu0
    %v1929 = vpop.f32.mrf.mxu0
    %1930 = vdwg.mxu0
    %v1931 = vadd.f32 %v1616, %v1925
    %v1932 = vadd.f32 %v1617, %v1927
    %v1933 = vxor.u32 %v1931, 2147483648
    %v1934 = vxor.u32 %v1932, 2147483648
    %v1935 = vmul.f32 %v1933, 1.442695
    %v1936 = vpow.pop %v1935
    %v1937 = vmul.f32 %v1934, 1.442695
    %v1938 = vpow.pop %v1937
    %v1939 = vadd.f32 %v1936, 1.0
    %v1940 = vadd.f32 %v1938, 1.0
    %v1941 = vrcp.pop %v1939
    %v1942 = vmul.f32 1.0, %v1941
    %v1943 = vrcp.pop %v1940
    %v1944 = vmul.f32 1.0, %v1943
    %v1945 = vtanh.pop %v1932
    %v1946 = vmul.f32 %v1942, %v1880
    %v1947 = vmul.f32 %v1942, %v1945
    %1949 = vrot.lane.b32.xlu0 %v1947, 64
    %v1950 = vpop.permute.xlu0 %1949
    %v1952 = vadd.f32 %v1946, %v1950
    %v1953 = vtanh.pop %v1952
    %v1954 = vmul.f32 %v1944, %v1953
    %v1955 = vpack.c.bf16 %v1954, %v1954
    %1957 = vrot.lane.b32.xlu0 %v1955, 64
    %v1958 = vpop.permute.xlu0 %1957
    %v1960 = vsel %vm219, %v1958, 0
    %1962 = vmatprep.subr.bf16.mxu0 0
    %1963 = vmatpush1.bf16.msra.mxu0 0
    %1964 = vmatprep.subr.bf16.mxu0 0
    %1965 = vmatpush1.bf16.msra.mxu0 0
    %1966 = vmatprep.subr.bf16.mxu0 0
    %1967 = vmatpush1.bf16.msra.mxu0 0
    %1968 = vmatprep.subr.bf16.mxu0 0
    %1969 = vmatpush1.bf16.msra.mxu0 0
    %1970 = vmatprep.subr.bf16.mxu0 %v1665
    %1971 = vmatpush1.bf16.msra.mxu0 %v1664
    %1972 = vmatprep.subr.bf16.mxu0 %v1663
    %1973 = vmatpush1.bf16.msra.mxu0 %v1662
    %1974 = vmatprep.subr.bf16.mxu0 %v1661
    %1975 = vmatpush1.bf16.msra.mxu0 %v1660
    %1976 = vmatprep.subr.bf16.mxu0 %v1659
    %1977 = vmatpush1.bf16.msra.mxu0 %v1658
    %1978 = vmatprep.subr.bf16.mxu0 0
    %1979 = vmatpush2.bf16.msra.mxu0 0
    %1980 = vmatprep.subr.bf16.mxu0 0
    %1981 = vmatpush2.bf16.msra.mxu0 0
    %1982 = vmatprep.subr.bf16.mxu0 0
    %1983 = vmatpush2.bf16.msra.mxu0 0
    %1984 = vmatprep.subr.bf16.mxu0 0
    %1985 = vmatpush2.bf16.msra.mxu0 0
    %1986 = vmatprep.subr.bf16.mxu0 0
    %1987 = vmatpush2.bf16.msra.mxu0 0
    %1988 = vmatprep.subr.bf16.mxu0 0
    %1989 = vmatpush2.bf16.msra.mxu0 0
    %1990 = vmatprep.subr.bf16.mxu0 0
    %1991 = vmatpush2.bf16.msra.mxu0 0
    %1992 = vmatprep.subr.bf16.mxu0 0
    %1993 = vmatpush2.bf16.msra.mxu0 0
    %1994 = vmatprep.mubr.bf16.mxu0 0
    %1995 = vmatmul.mubr.bf16.gmra.mxu0 %v1960
    %v1996 = vpop.f32.mrf.mxu0
    %v1997 = vadd.f32 0.0, %v1996
    %v1998 = vpop.f32.mrf.mxu0
    %v1999 = vadd.f32 0.0, %v1998
    %v2000 = vpop.f32.mrf.mxu0
    %v2001 = vpop.f32.mrf.mxu0
    %2002 = vdwg.mxu0
    %v2003 = vadd.f32 %v1618, %v1997
    %v2004 = vadd.f32 %v1619, %v1999
    %v2005 = vxor.u32 %v2003, 2147483648
    %v2006 = vxor.u32 %v2004, 2147483648
    %v2007 = vmul.f32 %v2005, 1.442695
    %v2008 = vpow.pop %v2007
    %v2009 = vmul.f32 %v2006, 1.442695
    %v2010 = vpow.pop %v2009
    %v2011 = vadd.f32 %v2008, 1.0
    %v2012 = vadd.f32 %v2010, 1.0
    %v2013 = vrcp.pop %v2011
    %v2014 = vmul.f32 1.0, %v2013
    %v2015 = vrcp.pop %v2012
    %v2016 = vmul.f32 1.0, %v2015
    %v2017 = vtanh.pop %v2004
    %v2018 = vmul.f32 %v2014, %v1952
    %v2019 = vmul.f32 %v2014, %v2017
    %2021 = vrot.lane.b32.xlu0 %v2019, 64
    %v2022 = vpop.permute.xlu0 %2021
    %v2024 = vadd.f32 %v2018, %v2022
    %v2025 = vtanh.pop %v2024
    %v2026 = vmul.f32 %v2016, %v2025
    %v2027 = vpack.c.bf16 %v2026, %v2026
    %2029 = vrot.lane.b32.xlu0 %v2027, 64
    %v2030 = vpop.permute.xlu0 %2029
    %v2032 = vsel %vm219, %v2030, 0
    %2034 = vmatprep.subr.bf16.mxu0 0
    %2035 = vmatpush1.bf16.msra.mxu0 0
    %2036 = vmatprep.subr.bf16.mxu0 0
    %2037 = vmatpush1.bf16.msra.mxu0 0
    %2038 = vmatprep.subr.bf16.mxu0 0
    %2039 = vmatpush1.bf16.msra.mxu0 0
    %2040 = vmatprep.subr.bf16.mxu0 0
    %2041 = vmatpush1.bf16.msra.mxu0 0
    %2042 = vmatprep.subr.bf16.mxu0 %v1665
    %2043 = vmatpush1.bf16.msra.mxu0 %v1664
    %2044 = vmatprep.subr.bf16.mxu0 %v1663
    %2045 = vmatpush1.bf16.msra.mxu0 %v1662
    %2046 = vmatprep.subr.bf16.mxu0 %v1661
    %2047 = vmatpush1.bf16.msra.mxu0 %v1660
    %2048 = vmatprep.subr.bf16.mxu0 %v1659
    %2049 = vmatpush1.bf16.msra.mxu0 %v1658
    %2050 = vmatprep.subr.bf16.mxu0 0
    %2051 = vmatpush2.bf16.msra.mxu0 0
    %2052 = vmatprep.subr.bf16.mxu0 0
    %2053 = vmatpush2.bf16.msra.mxu0 0
    %2054 = vmatprep.subr.bf16.mxu0 0
    %2055 = vmatpush2.bf16.msra.mxu0 0
    %2056 = vmatprep.subr.bf16.mxu0 0
    %2057 = vmatpush2.bf16.msra.mxu0 0
    %2058 = vmatprep.subr.bf16.mxu0 0
    %2059 = vmatpush2.bf16.msra.mxu0 0
    %2060 = vmatprep.subr.bf16.mxu0 0
    %2061 = vmatpush2.bf16.msra.mxu0 0
    %2062 = vmatprep.subr.bf16.mxu0 0
    %2063 = vmatpush2.bf16.msra.mxu0 0
    %2064 = vmatprep.subr.bf16.mxu0 0
    %2065 = vmatpush2.bf16.msra.mxu0 0
    %2066 = vmatprep.mubr.bf16.mxu0 0
    %2067 = vmatmul.mubr.bf16.gmra.mxu0 %v2032
    %v2068 = vpop.f32.mrf.mxu0
    %v2069 = vadd.f32 0.0, %v2068
    %v2070 = vpop.f32.mrf.mxu0
    %v2071 = vadd.f32 0.0, %v2070
    %v2072 = vpop.f32.mrf.mxu0
    %v2073 = vpop.f32.mrf.mxu0
    %2074 = vdwg.mxu0
    %v2075 = vadd.f32 %v1620, %v2069
    %v2076 = vadd.f32 %v1621, %v2071
    %v2077 = vxor.u32 %v2075, 2147483648
    %v2078 = vxor.u32 %v2076, 2147483648
    %v2079 = vmul.f32 %v2077, 1.442695
    %v2080 = vpow.pop %v2079
    %v2081 = vmul.f32 %v2078, 1.442695
    %v2082 = vpow.pop %v2081
    %v2083 = vadd.f32 %v2080, 1.0
    %v2084 = vadd.f32 %v2082, 1.0
    %v2085 = vrcp.pop %v2083
    %v2086 = vmul.f32 1.0, %v2085
    %v2087 = vrcp.pop %v2084
    %v2088 = vmul.f32 1.0, %v2087
    %v2089 = vtanh.pop %v2076
    %v2090 = vmul.f32 %v2086, %v2024
    %v2091 = vmul.f32 %v2086, %v2089
    %2093 = vrot.lane.b32.xlu0 %v2091, 64
    %v2094 = vpop.permute.xlu0 %2093
    %v2096 = vadd.f32 %v2090, %v2094
    %v2097 = vtanh.pop %v2096
    %v2098 = vmul.f32 %v2088, %v2097
    %v2099 = vpack.c.bf16 %v2098, %v2098
    %2101 = vrot.lane.b32.xlu0 %v2099, 64
    %v2102 = vpop.permute.xlu0 %2101
    %v2104 = vsel %vm219, %v2102, 0
    %2106 = vmatprep.subr.bf16.mxu0 0
    %2107 = vmatpush1.bf16.msra.mxu0 0
    %2108 = vmatprep.subr.bf16.mxu0 0
    %2109 = vmatpush1.bf16.msra.mxu0 0
    %2110 = vmatprep.subr.bf16.mxu0 0
    %2111 = vmatpush1.bf16.msra.mxu0 0
    %2112 = vmatprep.subr.bf16.mxu0 0
    %2113 = vmatpush1.bf16.msra.mxu0 0
    %2114 = vmatprep.subr.bf16.mxu0 %v1665
    %2115 = vmatpush1.bf16.msra.mxu0 %v1664
    %2116 = vmatprep.subr.bf16.mxu0 %v1663
    %2117 = vmatpush1.bf16.msra.mxu0 %v1662
    %2118 = vmatprep.subr.bf16.mxu0 %v1661
    %2119 = vmatpush1.bf16.msra.mxu0 %v1660
    %2120 = vmatprep.subr.bf16.mxu0 %v1659
    %2121 = vmatpush1.bf16.msra.mxu0 %v1658
    %2122 = vmatprep.subr.bf16.mxu0 0
    %2123 = vmatpush2.bf16.msra.mxu0 0
    %2124 = vmatprep.subr.bf16.mxu0 0
    %2125 = vmatpush2.bf16.msra.mxu0 0
    %2126 = vmatprep.subr.bf16.mxu0 0
    %2127 = vmatpush2.bf16.msra.mxu0 0
    %2128 = vmatprep.subr.bf16.mxu0 0
    %2129 = vmatpush2.bf16.msra.mxu0 0
    %2130 = vmatprep.subr.bf16.mxu0 0
    %2131 = vmatpush2.bf16.msra.mxu0 0
    %2132 = vmatprep.subr.bf16.mxu0 0
    %2133 = vmatpush2.bf16.msra.mxu0 0
    %2134 = vmatprep.subr.bf16.mxu0 0
    %2135 = vmatpush2.bf16.msra.mxu0 0
    %2136 = vmatprep.subr.bf16.mxu0 0
    %2137 = vmatpush2.bf16.msra.mxu0 0
    %2138 = vmatprep.mubr.bf16.mxu0 0
    %2139 = vmatmul.mubr.bf16.gmra.mxu0 %v2104
    %v2140 = vpop.f32.mrf.mxu0
    %v2141 = vadd.f32 0.0, %v2140
    %v2142 = vpop.f32.mrf.mxu0
    %v2143 = vadd.f32 0.0, %v2142
    %v2144 = vpop.f32.mrf.mxu0
    %v2145 = vpop.f32.mrf.mxu0
    %2146 = vdwg.mxu0
    %v2147 = vadd.f32 %v1622, %v2141
    %v2148 = vadd.f32 %v1623, %v2143
    %v2149 = vxor.u32 %v2147, 2147483648
    %v2150 = vxor.u32 %v2148, 2147483648
    %v2151 = vmul.f32 %v2149, 1.442695
    %v2152 = vpow.pop %v2151
    %v2153 = vmul.f32 %v2150, 1.442695
    %v2154 = vpow.pop %v2153
    %v2155 = vadd.f32 %v2152, 1.0
    %v2156 = vadd.f32 %v2154, 1.0
    %v2157 = vrcp.pop %v2155
    %v2158 = vmul.f32 1.0, %v2157
    %v2159 = vrcp.pop %v2156
    %v2160 = vmul.f32 1.0, %v2159
    %v2161 = vtanh.pop %v2148
    %v2162 = vmul.f32 %v2158, %v2096
    %v2163 = vmul.f32 %v2158, %v2161
    %2165 = vrot.lane.b32.xlu0 %v2163, 64
    %v2166 = vpop.permute.xlu0 %2165
    %v2168 = vadd.f32 %v2162, %v2166
    %v2169 = vtanh.pop %v2168
    %v2170 = vmul.f32 %v2160, %v2169
    %v2171 = vpack.c.bf16 %v2170, %v2170
    %2173 = vrot.lane.b32.xlu0 %v2171, 64
    %v2174 = vpop.permute.xlu0 %2173
    %v2176 = vsel %vm219, %v2174, 0
    %2178 = vmatprep.subr.bf16.mxu0 0
    %2179 = vmatpush1.bf16.msra.mxu0 0
    %2180 = vmatprep.subr.bf16.mxu0 0
    %2181 = vmatpush1.bf16.msra.mxu0 0
    %2182 = vmatprep.subr.bf16.mxu0 0
    %2183 = vmatpush1.bf16.msra.mxu0 0
    %2184 = vmatprep.subr.bf16.mxu0 0
    %2185 = vmatpush1.bf16.msra.mxu0 0
    %2186 = vmatprep.subr.bf16.mxu0 %v1665
    %2187 = vmatpush1.bf16.msra.mxu0 %v1664
    %2188 = vmatprep.subr.bf16.mxu0 %v1663
    %2189 = vmatpush1.bf16.msra.mxu0 %v1662
    %2190 = vmatprep.subr.bf16.mxu0 %v1661
    %2191 = vmatpush1.bf16.msra.mxu0 %v1660
    %2192 = vmatprep.subr.bf16.mxu0 %v1659
    %2193 = vmatpush1.bf16.msra.mxu0 %v1658
    %2194 = vmatprep.subr.bf16.mxu0 0
    %2195 = vmatpush2.bf16.msra.mxu0 0
    %2196 = vmatprep.subr.bf16.mxu0 0
    %2197 = vmatpush2.bf16.msra.mxu0 0
    %2198 = vmatprep.subr.bf16.mxu0 0
    %2199 = vmatpush2.bf16.msra.mxu0 0
    %2200 = vmatprep.subr.bf16.mxu0 0
    %2201 = vmatpush2.bf16.msra.mxu0 0
    %2202 = vmatprep.subr.bf16.mxu0 0
    %2203 = vmatpush2.bf16.msra.mxu0 0
    %2204 = vmatprep.subr.bf16.mxu0 0
    %2205 = vmatpush2.bf16.msra.mxu0 0
    %2206 = vmatprep.subr.bf16.mxu0 0
    %2207 = vmatpush2.bf16.msra.mxu0 0
    %2208 = vmatprep.subr.bf16.mxu0 0
    %2209 = vmatpush2.bf16.msra.mxu0 0
    %2210 = vmatprep.mubr.bf16.mxu0 0
    %2211 = vmatmul.mubr.bf16.gmra.mxu0 %v2176
    %v2212 = vpop.f32.mrf.mxu0
    %v2213 = vadd.f32 0.0, %v2212
    %v2214 = vpop.f32.mrf.mxu0
    %v2215 = vadd.f32 0.0, %v2214
    %v2216 = vpop.f32.mrf.mxu0
    %v2217 = vpop.f32.mrf.mxu0
    %2218 = vdwg.mxu0
    %v2219 = vadd.f32 %v1624, %v2213
    %v2220 = vadd.f32 %v1625, %v2215
    %v2221 = vxor.u32 %v2219, 2147483648
    %v2222 = vxor.u32 %v2220, 2147483648
    %v2223 = vmul.f32 %v2221, 1.442695
    %v2224 = vpow.pop %v2223
    %v2225 = vmul.f32 %v2222, 1.442695
    %v2226 = vpow.pop %v2225
    %v2227 = vadd.f32 %v2224, 1.0
    %v2228 = vadd.f32 %v2226, 1.0
    %v2229 = vrcp.pop %v2227
    %v2230 = vmul.f32 1.0, %v2229
    %v2231 = vrcp.pop %v2228
    %v2232 = vmul.f32 1.0, %v2231
    %v2233 = vtanh.pop %v2220
    %v2234 = vmul.f32 %v2230, %v2168
    %v2235 = vmul.f32 %v2230, %v2233
    %2237 = vrot.lane.b32.xlu0 %v2235, 64
    %v2238 = vpop.permute.xlu0 %2237
    %v2240 = vadd.f32 %v2234, %v2238
    %v2241 = vtanh.pop %v2240
    %v2242 = vmul.f32 %v2232, %v2241
    %2244 = vrot.lane.b32.xlu0 %v1425, 64
    %v2245 = vpop.permute.xlu0 %2244
    %v2247 = vrot.slane %v1425, 1
    %2248 = vrot.lane.b32.xlu0 %v2247, 96
    %v2249 = vpop.permute.xlu0 %2248
    %v2251 = vsel %vm108, %v2245, %v2249
    %2252 = vrot.lane.b32.xlu0 %v1425, 32
    %v2253 = vpop.permute.xlu0 %2252
    %2255 = vrot.lane.b32.xlu0 %v2247, 64
    %v2256 = vpop.permute.xlu0 %2255
    %v2258 = vsel %vm108, %v2253, %v2256
    %2260 = vrot.lane.b32.xlu0 %v2242, 64
    %v2261 = vpop.permute.xlu0 %2260
    %v2263 = vrot.slane %v2242, 1
    %2264 = vrot.lane.b32.xlu0 %v2263, 96
    %v2265 = vpop.permute.xlu0 %2264
    %v2267 = vsel %vm108, %v2261, %v2265
    %2268 = vrot.lane.b32.xlu0 %v2242, 32
    %v2269 = vpop.permute.xlu0 %2268
    %2271 = vrot.lane.b32.xlu0 %v2263, 64
    %v2272 = vpop.permute.xlu0 %2271
    %v2274 = vsel %vm108, %v2269, %v2272
    %v2276 = vrot.slane %v2251, 6
    %v2279 = vrot.slane %v2258, 5
    %v2282 = vrot.slane %v2267, 6
    %v2285 = vrot.slane %v2274, 5
    %vm2287 = vcmask 1040384
    %v2288 = vsel %vm2287, %v2276, %v2279
    %vm2289 = vcmask 1041408
    %v2290 = vsel %vm2289, %v2288, %v2282
    %vm2291 = vcmask 1042432
    %v2292 = vsel %vm2291, %v2290, %v2285
    %v2293 = vmax.f32 %v2292, 0.0
    %v2294 = vld [vmem:[%s8] sm:$0xff]
    %v2295 = vld [vmem:[%s8 + $0x8] sm:$0xff]
    %v2296 = vld [vmem:[%s8 + $0x10] sm:$0xff]
    %v2297 = vld [vmem:[%s8 + $0x18] sm:$0xff]
    %v2298 = vld [vmem:[%s8 + $0x20] sm:$0xff]
    %v2299 = vld [vmem:[%s8 + $0x28] sm:$0xff]
    %v2300 = vld [vmem:[%s8 + $0x30] sm:$0xff]
    %v2301 = vld [vmem:[%s8 + $0x38] sm:$0xff]
    %v2302 = vld [vmem:[%s9] sm:$0x1]
    %v2304 = vlaneseq
    %v2305 = vshrl.u32 %v2304, 7
    %v2306 = vsub.s32 0, %v2305
    %v2307 = vrot.slane %v2302, %v2306
    %v2310 = vsel %vm219, %v2293, 0
    %2312 = vmatprep.subr.mxu0 0.0
    %2313 = vmatpush1.msra.mxu0 0.0
    %2314 = vmatprep.subr.mxu0 0.0
    %2315 = vmatpush1.msra.mxu0 0.0
    %2316 = vmatprep.subr.mxu0 0.0
    %2317 = vmatpush1.msra.mxu0 0.0
    %2318 = vmatprep.subr.mxu0 0.0
    %2319 = vmatpush1.msra.mxu0 0.0
    %2320 = vmatprep.subr.mxu0 0.0
    %2321 = vmatpush1.msra.mxu0 0.0
    %2322 = vmatprep.subr.mxu0 0.0
    %2323 = vmatpush1.msra.mxu0 0.0
    %2324 = vmatprep.subr.mxu0 0.0
    %2325 = vmatpush1.msra.mxu0 0.0
    %2326 = vmatprep.subr.mxu0 0.0
    %2327 = vmatpush1.msra.mxu0 0.0
    %2328 = vmatprep.subr.mxu0 0.0
    %2329 = vmatpush1.msra.mxu0 %v2301
    %2330 = vmatprep.subr.mxu0 0.0
    %2331 = vmatpush1.msra.mxu0 %v2300
    %2332 = vmatprep.subr.mxu0 0.0
    %2333 = vmatpush1.msra.mxu0 %v2299
    %2334 = vmatprep.subr.mxu0 0.0
    %2335 = vmatpush1.msra.mxu0 %v2298
    %2336 = vmatprep.subr.mxu0 0.0
    %2337 = vmatpush1.msra.mxu0 %v2297
    %2338 = vmatprep.subr.mxu0 0.0
    %2339 = vmatpush1.msra.mxu0 %v2296
    %2340 = vmatprep.subr.mxu0 0.0
    %2341 = vmatpush1.msra.mxu0 %v2295
    %2342 = vmatprep.subr.mxu0 0.0
    %2343 = vmatpush1.msra.mxu0 %v2294
    %2344 = vmatprep.subr.mxu0 0.0
    %2345 = vmatpush2.msra.mxu0 0.0
    %2346 = vmatprep.subr.mxu0 0.0
    %2347 = vmatpush2.msra.mxu0 0.0
    %2348 = vmatprep.subr.mxu0 0.0
    %2349 = vmatpush2.msra.mxu0 0.0
    %2350 = vmatprep.subr.mxu0 0.0
    %2351 = vmatpush2.msra.mxu0 0.0
    %2352 = vmatprep.subr.mxu0 0.0
    %2353 = vmatpush2.msra.mxu0 0.0
    %2354 = vmatprep.subr.mxu0 0.0
    %2355 = vmatpush2.msra.mxu0 0.0
    %2356 = vmatprep.subr.mxu0 0.0
    %2357 = vmatpush2.msra.mxu0 0.0
    %2358 = vmatprep.subr.mxu0 0.0
    %2359 = vmatpush2.msra.mxu0 0.0
    %2360 = vmatprep.subr.mxu0 0.0
    %2361 = vmatpush2.msra.mxu0 0.0
    %2362 = vmatprep.subr.mxu0 0.0
    %2363 = vmatpush2.msra.mxu0 0.0
    %2364 = vmatprep.subr.mxu0 0.0
    %2365 = vmatpush2.msra.mxu0 0.0
    %2366 = vmatprep.subr.mxu0 0.0
    %2367 = vmatpush2.msra.mxu0 0.0
    %2368 = vmatprep.subr.mxu0 0.0
    %2369 = vmatpush2.msra.mxu0 0.0
    %2370 = vmatprep.subr.mxu0 0.0
    %2371 = vmatpush2.msra.mxu0 0.0
    %2372 = vmatprep.subr.mxu0 0.0
    %2373 = vmatpush2.msra.mxu0 0.0
    %2374 = vmatprep.subr.mxu0 0.0
    %2375 = vmatpush2.msra.mxu0 0.0
    %2376 = vmatprep.mubr.f32.mxu0 0.0
    %2377 = vmatmul.mubr.f32.gmra.mxu0 %v2310
    %v2378 = vpop.f32.mrf.mxu0
    %v2379 = vadd.f32 %v2307, %v2378
    %v2380 = vpop.f32.mrf.mxu0
    %2381 = vdwg.mxu0
    %vm2382 = vcmask 35840
    %v2383 = vsel %vm2382, %v2379, -inf
    %2384 = vmax.xlane.f32.xlu0 %v2383
    %v2385 = vpop.xlane.xlu0 %2384
    %v2386 = vsub.f32 %v2379, %v2385
    %v2387 = vmul.f32 %v2386, 1.442695
    %v2388 = vpow.pop %v2387
    %v2389 = vsel %vm2382, %v2388, 0.0
    %2390 = vadd.xlane.f32.xlu0 %v2389
    %v2391 = vpop.xlane.xlu0 %2390
    %v2392 = vrcp.pop %v2391
    %v2393 = vmul.f32 %v2388, %v2392
    %2394 = vst.msk [vmem:[#allocation7] sm:$0xf] %vm2382, %v2393
    // Predicated region
    $region50: #{variable_lstm_net_forward.1} parent=1 // pred_check
      _
    $region51: #{variable_lstm_net_forward.1} parent=1 // pred_check_branch
      %2396 = sbr.rel (0) target = $region53
    $region52: #{variable_lstm_net_forward.1} parent=1 // pred_region
      %s2398 = ssub.s32 64, 64
      %2399 = vsyncadd [#allocation4], %s2398
      %s2401 = sshll.u32 [#allocation7], 4
      %s2402 = int_to_ptr.vmem [resolvable:$true] %s2401
      %2404 = dma.vmem_to_hbm [thread:$0]  %s2402, 64, %s10, [#allocation4]
    $region53: #{variable_lstm_net_forward.1} parent=1 // pred_fallthru
      _
    // Predicated region
    $region54: #{variable_lstm_net_forward.1} parent=1 // pred_check
      _
    $region55: #{variable_lstm_net_forward.1} parent=1 // pred_check_branch
      %2406 = sbr.rel (0) target = $region57
    $region56: #{variable_lstm_net_forward.1} parent=1 // pred_region
      %2407 = dma.done [#allocation4], 64
    $region57: #{variable_lstm_net_forward.1} parent=1 // pred_fallthru
      _
    %2408 = vsyncpa [#allocation3], 1
    %2409 = vsyncpa [#allocation6], 1
    %2410 = vsyncpa [#allocation4], 1

</llo_original>
